<compile_context>
chip_gen: v5e
topology: v5e:2x2
jax: 0.10.0
libtpu: 0.0.40
codegen_flags: <defaults>
</compile_context>

<pallas_src>
import jax
import jax.numpy as jnp
from jax.experimental import pallas as pl
from jax.experimental.pallas import tpu as pltpu

LN_EPS = 1e-5  # torch.nn.LayerNorm default


def _round_up(x, m):
    return -(-x // m) * m


def _pick_pack_factor(all_dims, d_out_last, width_cap=512):
    """Row-packing factor r: run on (rows/r, r*dim) slabs with block-diagonal
    weights.  Chosen so the packed output width is a multiple of 128 (unmasked
    full-lane stores / dense output DMA) while capping the r^2 weight blow-up."""
    if d_out_last >= 128:
        return 1
    max_d = max(all_dims)
    for r in (2, 4, 8, 16):
        if (r * d_out_last) % 128 == 0 and r * max_d <= width_cap:
            return r
    return 1


def _choose_tile_rows(np_rows, per_row_bytes, resident_bytes, tile_rows=None):
    """Row tile (in packed rows), from an explicit VMEM budget: resident
    weights + double-buffered in/out tiles + live f32 intermediates must stay
    well under the smallest per-core VMEM (v7x: 64 MiB physical / 32 MiB scoped
    default; v5e scoped default 16 MiB -- we raise vmem_limit_bytes)."""
    if tile_rows is None:
        budget = 24 * 1024 * 1024 - resident_bytes
        tile_rows = max(64, budget // max(per_row_bytes, 1))
    tile_rows = int(tile_rows)
    if np_rows <= 8:
        return int(np_rows)          # single block; dims equal the array dims
    if np_rows >= 32:
        # >= 4 grid steps => >= 2 pipelined steps per TensorCore on v7x
        # megacore, so the x DMA / output writeback overlap with compute.
        tile_rows = min(tile_rows, max(8, ((np_rows // 4) // 8) * 8))
    return max(8, min((tile_rows // 8) * 8, (np_rows // 8) * 8))


def _block_diag(w, r):
    if r == 1:
        return w
    return jnp.kron(jnp.eye(r, dtype=w.dtype), w)


def _make_fused_decoder_kernel(layer_meta, r, matmul_dtype):
    """Fused multi-layer ResidualBlock kernel (activations packed r rows/row).

    Ref order: x_ref, then per layer (w1, w2, [wr], vecs, [mmean if r>1]),
    then o_ref.  vecs rows: b1 | b2(+br) | gamma | beta, each tiled r times.
    """

    def kernel(x_ref, *refs):
        o_ref = refs[-1]
        wrefs = refs[:-1]
        h = x_ref[...].astype(jnp.float32)
        i = 0
        for meta in layer_meta:
            wh = r * meta["hidden_dim"]
            wo = r * meta["output_dim"]
            w1 = wrefs[i][...]
            w2 = wrefs[i + 1][...]
            i += 2
            if meta["has_proj"]:
                wr = wrefs[i][...]
                i += 1
            vecs = wrefs[i]
            i += 1
            if r > 1:
                mmean = wrefs[i][...]
                i += 1
            b1 = vecs[0:1, 0:wh]
            b2 = vecs[1:2, 0:wo]        # b2 (+ br folded in for proj layers)
            gamma = vecs[2:3, 0:wo]
            beta = vecs[3:4, 0:wo]

            hm = h.astype(matmul_dtype)
            z = jnp.dot(hm, w1, preferred_element_type=jnp.float32) + b1
            z = jnp.maximum(z, 0.0)
            out = jnp.dot(z.astype(matmul_dtype), w2,
                          preferred_element_type=jnp.float32)
            if meta["has_proj"]:
                # With packed K = r*d_in >= 128 the MXU contraction is already
                # full, so fusing [W2; Wr] into one dot (which would need an
                # in-kernel lane concat) buys nothing.
                out = out + jnp.dot(hm, wr, preferred_element_type=jnp.float32)
            else:
                out = out + h            # identity residual (d_in == d_out)
            out = out + b2
            # TODO(synk): training-mode dropout mask not implemented (eval =>
            # identity); would use pltpu.prng_seed / pltpu.prng_random_bits.
            if r > 1:
                # Per-original-row (segmented) LayerNorm stats via one f32
                # matmul with kron(I_r, 11^T/d); centered two-pass so there is
                # no E[x^2]-mean^2 cancellation.
                mean = jnp.dot(out, mmean, preferred_element_type=jnp.float32)
                c = out - mean
                var = jnp.dot(c * c, mmean, preferred_element_type=jnp.float32)
            else:
                mean = jnp.mean(out, axis=-1, keepdims=True)
                c = out - mean
                var = jnp.mean(c * c, axis=-1, keepdims=True)
            # LayerNorm math in f32 (v5e has no bf16 VPU/EUP); folded scale.
            h = c * (jax.lax.rsqrt(var + LN_EPS) * gamma) + beta
        o_ref[...] = h.astype(o_ref.dtype)

    return kernel


def temporal_decoder(x, layer_params, *, tile_rows=None,
                     matmul_dtype=jnp.bfloat16, pack_rows=None):
    """x: (B, T, input_dim) -> (B, T, output_dim); per-time-step processing.

    All ResidualBlocks run inside one pallas_call (activation never leaves
    VMEM/vregs between layers).  matmul_dtype=bf16 feeds the MXU in its native
    dtype (v6e/v7x: 918/996 TF/s vs multi-pass f32) and halves weight DMA;
    pass jnp.float32 for full-precision matmuls.
    """
    b, t, d_in0 = x.shape
    n = b * t

    metas = []
    d_in = d_in0
    for p in layer_params:
        metas.append(dict(input_dim=d_in,
                          hidden_dim=p["w1"].shape[1],
                          output_dim=p["w2"].shape[1],
                          has_proj="wr" in p))
        d_in = metas[-1]["output_dim"]
    d_out_last = d_in

    all_dims = ([d_in0] + [m["hidden_dim"] for m in metas]
                + [m["output_dim"] for m in metas])
    r = _pick_pack_factor(all_dims, d_out_last) if pack_rows is None \
        else int(pack_rows)

    x2d = x.reshape(n, d_in0)
    n_pad = _round_up(n, r)
    if n_pad != n:
        # Zero-pad so the packed row-major view is exact; the math is fully
        # row-independent and padded rows are sliced off below.
        x2d = jnp.pad(x2d, ((0, n_pad - n), (0, 0)))
    np_rows = n_pad // r
    xp = x2d.reshape(np_rows, r * d_in0)      # free: identical row-major memory

    # ---- resident (constant index_map) weight blocks ------------------------
    arrays = []
    block_shapes = []
    for p, m in zip(layer_params, metas):
        din, hdim, dout = m["input_dim"], m["hidden_dim"], m["output_dim"]
        wh, wo = r * hdim, r * dout
        arrays.append(_block_diag(p["w1"].astype(jnp.float32), r)
                      .astype(matmul_dtype))
        block_shapes.append((r * din, wh))
        arrays.append(_block_diag(p["w2"].astype(jnp.float32), r)
                      .astype(matmul_dtype))
        block_shapes.append((wh, wo))
        if m["has_proj"]:
            arrays.append(_block_diag(p["wr"].astype(jnp.float32), r)
                          .astype(matmul_dtype))
            block_shapes.append((r * din, wo))
        # Pack the tiny per-feature vectors into one block (fewer DMA
        # descriptors / (8,128)-padded tiles than 4 separate (1, D) inputs);
        # br is folded into b2 so the projection path does one bias add.
        vw = _round_up(max(wh, wo), 128)
        b2 = p["b2"] + (p["br"] if m["has_proj"] else 0.0)
        vecs = jnp.zeros((4, vw), jnp.float32)
        vecs = vecs.at[0, :wh].set(jnp.tile(p["b1"].astype(jnp.float32), r))
        vecs = vecs.at[1, :wo].set(jnp.tile(b2.astype(jnp.float32), r))
        vecs = vecs.at[2, :wo].set(jnp.tile(p["gamma"].astype(jnp.float32), r))
        vecs = vecs.at[3, :wo].set(jnp.tile(p["beta"].astype(jnp.float32), r))
        arrays.append(vecs)
        block_shapes.append((4, vw))
        if r > 1:
            # Segmented-mean operator for the packed LayerNorm (f32).
            # TODO(synk): could be shared across layers with equal output_dim.
            mmean = _block_diag(jnp.full((dout, dout), 1.0 / dout, jnp.float32), r)
            arrays.append(mmean)
            block_shapes.append((wo, wo))

    weight_bytes = int(sum(a.size * a.dtype.itemsize for a in arrays))

    # ---- tiling + explicit VMEM accounting -----------------------------------
    # Per packed row: double-buffered x and out tiles + ~4 live f32
    # intermediates of the widest layer.
    max_w = r * max(all_dims)
    per_row_bytes = 4 * (2 * r * d_in0 + 2 * r * d_out_last + 4 * max_w)
    tpr = _choose_tile_rows(np_rows, per_row_bytes, weight_bytes, tile_rows)
    grid = (pl.cdiv(np_rows, tpr),)
    footprint = weight_bytes + tpr * per_row_bytes
    vmem_limit = int(min(64 * 2 ** 20, max(32 * 2 ** 20, footprint + 8 * 2 ** 20)))

    # ---- cost estimate (executed FLOPs, including block-diag expansion) ------
    flops = 0
    for m in metas:
        f = m["input_dim"] * m["hidden_dim"] + m["hidden_dim"] * m["output_dim"]
        if m["has_proj"]:
            f += m["input_dim"] * m["output_dim"]
        f *= r
        if r > 1:
            f += 2 * r * m["output_dim"] * m["output_dim"]   # LN stat matmuls
        flops += 2 * n_pad * f
    out_itemsize = jnp.dtype(x.dtype).itemsize
    cost = pl.CostEstimate(
        flops=int(flops),
        transcendentals=int(n_pad * len(metas)),             # rsqrt per row/layer
        bytes_accessed=int(xp.size * xp.dtype.itemsize + weight_bytes
                           + n_pad * d_out_last * out_itemsize))

    kernel = _make_fused_decoder_kernel(metas, r, matmul_dtype)
    const_map = lambda i: (0, 0)
    row_map = lambda i: (i, 0)
    x_spec = pl.BlockSpec((tpr, r * d_in0), row_map)
    out_spec = pl.BlockSpec((tpr, r * d_out_last), row_map)

    def call(weight_pipeline_mode):
        if weight_pipeline_mode is None:
            wspecs = [pl.BlockSpec(s, const_map) for s in block_shapes]
        else:
            wspecs = [pl.BlockSpec(s, const_map,
                                   pipeline_mode=weight_pipeline_mode)
                      for s in block_shapes]
        return pl.pallas_call(
            kernel,
            out_shape=jax.ShapeDtypeStruct((np_rows, r * d_out_last), x.dtype),
            grid_spec=pltpu.PrefetchScalarGridSpec(
                num_scalar_prefetch=0,
                grid=grid,
                in_specs=[x_spec] + wspecs,
                out_specs=out_spec,
            ),
            compiler_params=pltpu.CompilerParams(
                dimension_semantics=("parallel",),
                vmem_limit_bytes=vmem_limit),
            cost_estimate=cost,
        )(xp, *arrays)

    try:
        # Weights have a constant index_map (DMA'd once) -> single-buffer them
        # so resident weight VMEM is halved (matters on v7x's 64 MiB VMEM and
        # v5e's 16 MiB scoped default).
        out_packed = call(pl.Buffered(1))
    except Exception:  # graceful fallback: default double buffering
        out_packed = call(None)

    # Free row-major view back to (rows, d_out); padded tail rows (garbage /
    # zero rows — row-independent math, dropped here) are sliced off.
    out2d = out_packed.reshape(n_pad, d_out_last)[:n]
    return out2d.reshape(b, t, d_out_last)


# ----------------------------------------------------------------------------
# Parameter init (nn.Linear-like uniform scale) and pure-JAX reference.
# ----------------------------------------------------------------------------

def init_residual_block_params(key, input_dim, output_dim, hidden_dim):
    keys = jax.random.split(key, 8)

    def lin(kw, kb, fan_in, fan_out):
        bound = 1.0 / jnp.sqrt(fan_in)
        w = jax.random.uniform(kw, (fan_in, fan_out), jnp.float32, -bound, bound)
        b = jax.random.uniform(kb, (fan_out,), jnp.float32, -bound, bound)
        return w, b

    p = {}
    p["w1"], p["b1"] = lin(keys[0], keys[1], input_dim, hidden_dim)
    p["w2"], p["b2"] = lin(keys[2], keys[3], hidden_dim, output_dim)
    if input_dim != output_dim:
        p["wr"], p["br"] = lin(keys[4], keys[5], input_dim, output_dim)
    p["gamma"] = jnp.ones((output_dim,), jnp.float32)
    p["beta"] = jnp.zeros((output_dim,), jnp.float32)
    return p


def init_temporal_decoder_params(key, input_dim, output_dim, hidden_dim,
                                 num_layers=1, expansion_factor=4):
    params = []
    d_in = input_dim
    for _ in range(num_layers):
        key, sub = jax.random.split(key)
        params.append(init_residual_block_params(
            sub, d_in, output_dim, hidden_dim * expansion_factor))
        d_in = output_dim
    return params


def _residual_block_ref(x, p):
    h = jnp.maximum(x @ p["w1"] + p["b1"], 0.0)
    out = h @ p["w2"] + p["b2"]
    res = x @ p["wr"] + p["br"] if "wr" in p else x
    out = out + res
    mean = out.mean(-1, keepdims=True)
    var = ((out - mean) ** 2).mean(-1, keepdims=True)
    out = (out - mean) / jnp.sqrt(var + LN_EPS)
    return out * p["gamma"] + p["beta"]


def _temporal_decoder_ref(x, layer_params):
    b, t, d = x.shape
    h = x.reshape(b * t, d)
    for p in layer_params:
        h = _residual_block_ref(h, p)
    return h.reshape(b, t, h.shape[-1])


if __name__ == "__main__":
    # Small shapes consistent with TiDE's temporal decoder.
    B, T = 2, 8
    INPUT_DIM, OUTPUT_DIM, HIDDEN_DIM = 32, 16, 8
    NUM_LAYERS, EXPANSION = 2, 4   # layer0: 32->16 (proj); layer1: 16->16 (identity)

    key = jax.random.PRNGKey(0)
    kx, kp = jax.random.split(key)
    x = jax.random.normal(kx, (B, T, INPUT_DIM), dtype=jnp.float32)
    params = init_temporal_decoder_params(
        kp, INPUT_DIM, OUTPUT_DIM, HIDDEN_DIM,
        num_layers=NUM_LAYERS, expansion_factor=EXPANSION)

    ref = _temporal_decoder_ref(x, params)

    # Default: bf16 MXU matmuls + lane-dense row packing (r = 128 // 16 = 8).
    # bf16 matmuls => expected mixed-precision error vs the f32 reference.
    out = jax.block_until_ready(temporal_decoder(x, params))
    assert out.shape == (B, T, OUTPUT_DIM), out.shape
    assert jnp.allclose(out, ref, atol=1e-1, rtol=5e-2), \
        float(jnp.abs(out - ref).max())

    # f32 matmuls, packed layout: tighter check of the block-diag/packed math.
    out_f32 = jax.block_until_ready(
        temporal_decoder(x, params, matmul_dtype=jnp.float32))
    assert jnp.allclose(out_f32, ref, atol=2e-2, rtol=2e-2), \
        float(jnp.abs(out_f32 - ref).max())

    # r = 1 fallback path (plain per-row layout, lane-reduction LayerNorm).
    out_r1 = jax.block_until_ready(
        temporal_decoder(x, params, matmul_dtype=jnp.float32, pack_rows=1))
    assert jnp.allclose(out_r1, ref, atol=2e-2, rtol=2e-2), \
        float(jnp.abs(out_r1 - ref).max())

    print("KERNEL_OK")
</pallas_src>

<mosaic_0001>
module attributes {stable_mosaic.version = 11 : i64} {
  func.func @kernel(%arg0: i32, %arg1: memref<2x256xf32, #tpu.memory_space<vmem>>, %arg2: memref<256x256xbf16, #tpu.memory_space<vmem>>, %arg3: memref<256x128xbf16, #tpu.memory_space<vmem>>, %arg4: memref<256x128xbf16, #tpu.memory_space<vmem>>, %arg5: memref<4x256xf32, #tpu.memory_space<vmem>>, %arg6: memref<128x128xf32, #tpu.memory_space<vmem>>, %arg7: memref<128x256xbf16, #tpu.memory_space<vmem>>, %arg8: memref<256x128xbf16, #tpu.memory_space<vmem>>, %arg9: memref<4x256xf32, #tpu.memory_space<vmem>>, %arg10: memref<128x128xf32, #tpu.memory_space<vmem>>, %arg11: memref<2x128xf32, #tpu.memory_space<vmem>>) attributes {dimension_semantics = [#tpu.dimension_semantics<parallel>], iteration_bounds = array<i64: 1>, scalar_prefetch = 0 : i64, scratch_operands = 0 : i64, tpu.core_type = #tpu.core_type<tc>, window_params = [{transform_indices = @transform_0, window_bounds = array<i64: 2, 256>}, {pipeline_mode = #tpu.pipeline_mode<synchronous>, transform_indices = @transform_1, window_bounds = array<i64: 256, 256>}, {pipeline_mode = #tpu.pipeline_mode<synchronous>, transform_indices = @transform_2, window_bounds = array<i64: 256, 128>}, {pipeline_mode = #tpu.pipeline_mode<synchronous>, transform_indices = @transform_3, window_bounds = array<i64: 256, 128>}, {pipeline_mode = #tpu.pipeline_mode<synchronous>, transform_indices = @transform_4, window_bounds = array<i64: 4, 256>}, {pipeline_mode = #tpu.pipeline_mode<synchronous>, transform_indices = @transform_5, window_bounds = array<i64: 128, 128>}, {pipeline_mode = #tpu.pipeline_mode<synchronous>, transform_indices = @transform_6, window_bounds = array<i64: 128, 256>}, {pipeline_mode = #tpu.pipeline_mode<synchronous>, transform_indices = @transform_7, window_bounds = array<i64: 256, 128>}, {pipeline_mode = #tpu.pipeline_mode<synchronous>, transform_indices = @transform_8, window_bounds = array<i64: 4, 256>}, {pipeline_mode = #tpu.pipeline_mode<synchronous>, transform_indices = @transform_9, window_bounds = array<i64: 128, 128>}, {transform_indices = @transform_10, window_bounds = array<i64: 2, 128>}]} {
    %c0 = arith.constant 0 : index
    %c0_0 = arith.constant 0 : index
    %0 = vector.load %arg1[%c0, %c0_0] : memref<2x256xf32, #tpu.memory_space<vmem>>, vector<2x256xf32>
    %c0_1 = arith.constant 0 : index
    %c0_2 = arith.constant 0 : index
    %1 = vector.load %arg2[%c0_1, %c0_2] : memref<256x256xbf16, #tpu.memory_space<vmem>>, vector<256x256xbf16>
    %c0_3 = arith.constant 0 : index
    %c0_4 = arith.constant 0 : index
    %2 = vector.load %arg3[%c0_3, %c0_4] : memref<256x128xbf16, #tpu.memory_space<vmem>>, vector<256x128xbf16>
    %c0_5 = arith.constant 0 : index
    %c0_6 = arith.constant 0 : index
    %3 = vector.load %arg4[%c0_5, %c0_6] : memref<256x128xbf16, #tpu.memory_space<vmem>>, vector<256x128xbf16>
    %c0_7 = arith.constant 0 : index
    %c0_8 = arith.constant 0 : index
    %4 = vector.load %arg6[%c0_7, %c0_8] : memref<128x128xf32, #tpu.memory_space<vmem>>, vector<128x128xf32>
    %c0_9 = arith.constant 0 : index
    %c0_10 = arith.constant 0 : index
    %5 = vector.load %arg5[%c0_9, %c0_10] : memref<4x256xf32, #tpu.memory_space<vmem>>, vector<1x256xf32>
    %c1 = arith.constant 1 : index
    %c0_11 = arith.constant 0 : index
    %6 = vector.load %arg5[%c1, %c0_11] : memref<4x256xf32, #tpu.memory_space<vmem>>, vector<1x128xf32>
    %c2 = arith.constant 2 : index
    %c0_12 = arith.constant 0 : index
    %7 = vector.load %arg5[%c2, %c0_12] : memref<4x256xf32, #tpu.memory_space<vmem>>, vector<1x128xf32>
    %c3 = arith.constant 3 : index
    %c0_13 = arith.constant 0 : index
    %8 = vector.load %arg5[%c3, %c0_13] : memref<4x256xf32, #tpu.memory_space<vmem>>, vector<1x128xf32>
    %9 = arith.truncf %0 : vector<2x256xf32> to vector<2x256xbf16>
    %cst = arith.constant dense<0.000000e+00> : vector<2x256xf32>
    %10 = tpu.matmul %9, %1, %cst {dimension_numbers = #tpu.dot_dimension_numbers<[1], [0], [0], [1], [0, 0, 1, 1], [], []>} : vector<2x256xbf16>, vector<256x256xbf16>, vector<2x256xf32> -> vector<2x256xf32>
    %11 = vector.broadcast %5 : vector<1x256xf32> to vector<2x256xf32>
    %12 = arith.addf %10, %11 : vector<2x256xf32>
    %cst_14 = arith.constant 0.000000e+00 : f32
    %13 = vector.broadcast %cst_14 : f32 to vector<2x256xf32>
    %14 = arith.maximumf %12, %13 : vector<2x256xf32>
    %15 = arith.truncf %14 : vector<2x256xf32> to vector<2x256xbf16>
    %cst_15 = arith.constant dense<0.000000e+00> : vector<2x128xf32>
    %16 = tpu.matmul %15, %2, %cst_15 {dimension_numbers = #tpu.dot_dimension_numbers<[1], [0], [0], [1], [0, 0, 1, 1], [], []>} : vector<2x256xbf16>, vector<256x128xbf16>, vector<2x128xf32> -> vector<2x128xf32>
    %cst_16 = arith.constant dense<0.000000e+00> : vector<2x128xf32>
    %17 = tpu.matmul %9, %3, %cst_16 {dimension_numbers = #tpu.dot_dimension_numbers<[1], [0], [0], [1], [0, 0, 1, 1], [], []>} : vector<2x256xbf16>, vector<256x128xbf16>, vector<2x128xf32> -> vector<2x128xf32>
    %18 = arith.addf %16, %17 : vector<2x128xf32>
    %19 = vector.broadcast %6 : vector<1x128xf32> to vector<2x128xf32>
    %20 = arith.addf %18, %19 : vector<2x128xf32>
    %cst_17 = arith.constant dense<0.000000e+00> : vector<2x128xf32>
    %21 = tpu.matmul %20, %4, %cst_17 {dimension_numbers = #tpu.dot_dimension_numbers<[1], [0], [0], [1], [0, 0, 1, 1], [], []>} : vector<2x128xf32>, vector<128x128xf32>, vector<2x128xf32> -> vector<2x128xf32>
    %22 = arith.subf %20, %21 : vector<2x128xf32>
    %23 = arith.mulf %22, %22 : vector<2x128xf32>
    %cst_18 = arith.constant dense<0.000000e+00> : vector<2x128xf32>
    %24 = tpu.matmul %23, %4, %cst_18 {dimension_numbers = #tpu.dot_dimension_numbers<[1], [0], [0], [1], [0, 0, 1, 1], [], []>} : vector<2x128xf32>, vector<128x128xf32>, vector<2x128xf32> -> vector<2x128xf32>
    %cst_19 = arith.constant 9.99999974E-6 : f32
    %25 = vector.broadcast %cst_19 : f32 to vector<2x128xf32>
    %26 = arith.addf %24, %25 : vector<2x128xf32>
    %27 = math.rsqrt %26 : vector<2x128xf32>
    %28 = vector.broadcast %7 : vector<1x128xf32> to vector<2x128xf32>
    %29 = arith.mulf %27, %28 : vector<2x128xf32>
    %30 = arith.mulf %22, %29 : vector<2x128xf32>
    %31 = vector.broadcast %8 : vector<1x128xf32> to vector<2x128xf32>
    %32 = arith.addf %30, %31 : vector<2x128xf32>
    %c0_20 = arith.constant 0 : index
    %c0_21 = arith.constant 0 : index
    %33 = vector.load %arg7[%c0_20, %c0_21] : memref<128x256xbf16, #tpu.memory_space<vmem>>, vector<128x256xbf16>
    %c0_22 = arith.constant 0 : index
    %c0_23 = arith.constant 0 : index
    %34 = vector.load %arg8[%c0_22, %c0_23] : memref<256x128xbf16, #tpu.memory_space<vmem>>, vector<256x128xbf16>
    %c0_24 = arith.constant 0 : index
    %c0_25 = arith.constant 0 : index
    %35 = vector.load %arg10[%c0_24, %c0_25] : memref<128x128xf32, #tpu.memory_space<vmem>>, vector<128x128xf32>
    %c0_26 = arith.constant 0 : index
    %c0_27 = arith.constant 0 : index
    %36 = vector.load %arg9[%c0_26, %c0_27] : memref<4x256xf32, #tpu.memory_space<vmem>>, vector<1x256xf32>
    %c1_28 = arith.constant 1 : index
    %c0_29 = arith.constant 0 : index
    %37 = vector.load %arg9[%c1_28, %c0_29] : memref<4x256xf32, #tpu.memory_space<vmem>>, vector<1x128xf32>
    %c2_30 = arith.constant 2 : index
    %c0_31 = arith.constant 0 : index
    %38 = vector.load %arg9[%c2_30, %c0_31] : memref<4x256xf32, #tpu.memory_space<vmem>>, vector<1x128xf32>
    %c3_32 = arith.constant 3 : index
    %c0_33 = arith.constant 0 : index
    %39 = vector.load %arg9[%c3_32, %c0_33] : memref<4x256xf32, #tpu.memory_space<vmem>>, vector<1x128xf32>
    %40 = arith.truncf %32 : vector<2x128xf32> to vector<2x128xbf16>
    %cst_34 = arith.constant dense<0.000000e+00> : vector<2x256xf32>
    %41 = tpu.matmul %40, %33, %cst_34 {dimension_numbers = #tpu.dot_dimension_numbers<[1], [0], [0], [1], [0, 0, 1, 1], [], []>} : vector<2x128xbf16>, vector<128x256xbf16>, vector<2x256xf32> -> vector<2x256xf32>
    %42 = vector.broadcast %36 : vector<1x256xf32> to vector<2x256xf32>
    %43 = arith.addf %41, %42 : vector<2x256xf32>
    %cst_35 = arith.constant 0.000000e+00 : f32
    %44 = vector.broadcast %cst_35 : f32 to vector<2x256xf32>
    %45 = arith.maximumf %43, %44 : vector<2x256xf32>
    %46 = arith.truncf %45 : vector<2x256xf32> to vector<2x256xbf16>
    %cst_36 = arith.constant dense<0.000000e+00> : vector<2x128xf32>
    %47 = tpu.matmul %46, %34, %cst_36 {dimension_numbers = #tpu.dot_dimension_numbers<[1], [0], [0], [1], [0, 0, 1, 1], [], []>} : vector<2x256xbf16>, vector<256x128xbf16>, vector<2x128xf32> -> vector<2x128xf32>
    %48 = arith.addf %47, %32 : vector<2x128xf32>
    %49 = vector.broadcast %37 : vector<1x128xf32> to vector<2x128xf32>
    %50 = arith.addf %48, %49 : vector<2x128xf32>
    %cst_37 = arith.constant dense<0.000000e+00> : vector<2x128xf32>
    %51 = tpu.matmul %50, %35, %cst_37 {dimension_numbers = #tpu.dot_dimension_numbers<[1], [0], [0], [1], [0, 0, 1, 1], [], []>} : vector<2x128xf32>, vector<128x128xf32>, vector<2x128xf32> -> vector<2x128xf32>
    %52 = arith.subf %50, %51 : vector<2x128xf32>
    %53 = arith.mulf %52, %52 : vector<2x128xf32>
    %cst_38 = arith.constant dense<0.000000e+00> : vector<2x128xf32>
    %54 = tpu.matmul %53, %35, %cst_38 {dimension_numbers = #tpu.dot_dimension_numbers<[1], [0], [0], [1], [0, 0, 1, 1], [], []>} : vector<2x128xf32>, vector<128x128xf32>, vector<2x128xf32> -> vector<2x128xf32>
    %cst_39 = arith.constant 9.99999974E-6 : f32
    %55 = vector.broadcast %cst_39 : f32 to vector<2x128xf32>
    %56 = arith.addf %54, %55 : vector<2x128xf32>
    %57 = math.rsqrt %56 : vector<2x128xf32>
    %58 = vector.broadcast %38 : vector<1x128xf32> to vector<2x128xf32>
    %59 = arith.mulf %57, %58 : vector<2x128xf32>
    %60 = arith.mulf %52, %59 : vector<2x128xf32>
    %61 = vector.broadcast %39 : vector<1x128xf32> to vector<2x128xf32>
    %62 = arith.addf %60, %61 : vector<2x128xf32>
    %c0_40 = arith.constant 0 : index
    %c0_41 = arith.constant 0 : index
    %63 = vector.load %arg11[%c0_40, %c0_41] : memref<2x128xf32, #tpu.memory_space<vmem>>, vector<2x128xf32>
    tpu.vector_store %arg11[%c0_40, %c0_41], %62 {strides = array<i32>} : memref<2x128xf32, #tpu.memory_space<vmem>>, vector<2x128xf32>,
    return
  }
  func.func @transform_0(%arg0: i32) -> (i32, i32) {
    %c0_i32 = arith.constant 0 : i32
    %c0_i32_0 = arith.constant 0 : i32
    return %arg0, %c0_i32 : i32, i32
  }
  func.func @transform_1(%arg0: i32) -> (i32, i32) {
    %c0_i32 = arith.constant 0 : i32
    %c0_i32_0 = arith.constant 0 : i32
    %c0_i32_1 = arith.constant 0 : i32
    return %c0_i32, %c0_i32_0 : i32, i32
  }
  func.func @transform_2(%arg0: i32) -> (i32, i32) {
    %c0_i32 = arith.constant 0 : i32
    %c0_i32_0 = arith.constant 0 : i32
    %c0_i32_1 = arith.constant 0 : i32
    return %c0_i32, %c0_i32_0 : i32, i32
  }
  func.func @transform_3(%arg0: i32) -> (i32, i32) {
    %c0_i32 = arith.constant 0 : i32
    %c0_i32_0 = arith.constant 0 : i32
    %c0_i32_1 = arith.constant 0 : i32
    return %c0_i32, %c0_i32_0 : i32, i32
  }
  func.func @transform_4(%arg0: i32) -> (i32, i32) {
    %c0_i32 = arith.constant 0 : i32
    %c0_i32_0 = arith.constant 0 : i32
    %c0_i32_1 = arith.constant 0 : i32
    return %c0_i32, %c0_i32_0 : i32, i32
  }
  func.func @transform_5(%arg0: i32) -> (i32, i32) {
    %c0_i32 = arith.constant 0 : i32
    %c0_i32_0 = arith.constant 0 : i32
    %c0_i32_1 = arith.constant 0 : i32
    return %c0_i32, %c0_i32_0 : i32, i32
  }
  func.func @transform_6(%arg0: i32) -> (i32, i32) {
    %c0_i32 = arith.constant 0 : i32
    %c0_i32_0 = arith.constant 0 : i32
    %c0_i32_1 = arith.constant 0 : i32
    return %c0_i32, %c0_i32_0 : i32, i32
  }
  func.func @transform_7(%arg0: i32) -> (i32, i32) {
    %c0_i32 = arith.constant 0 : i32
    %c0_i32_0 = arith.constant 0 : i32
    %c0_i32_1 = arith.constant 0 : i32
    return %c0_i32, %c0_i32_0 : i32, i32
  }
  func.func @transform_8(%arg0: i32) -> (i32, i32) {
    %c0_i32 = arith.constant 0 : i32
    %c0_i32_0 = arith.constant 0 : i32
    %c0_i32_1 = arith.constant 0 : i32
    return %c0_i32, %c0_i32_0 : i32, i32
  }
  func.func @transform_9(%arg0: i32) -> (i32, i32) {
    %c0_i32 = arith.constant 0 : i32
    %c0_i32_0 = arith.constant 0 : i32
    %c0_i32_1 = arith.constant 0 : i32
    return %c0_i32, %c0_i32_0 : i32, i32
  }
  func.func @transform_10(%arg0: i32) -> (i32, i32) {
    %c0_i32 = arith.constant 0 : i32
    %c0_i32_0 = arith.constant 0 : i32
    return %arg0, %c0_i32 : i32, i32
  }
}

module attributes {stable_mosaic.version = 11 : i64} {
  func.func @kernel(%arg0: i32, %arg1: memref<2x256xf32, #tpu.memory_space<vmem>>, %arg2: memref<256x256xbf16, #tpu.memory_space<vmem>>, %arg3: memref<256x128xbf16, #tpu.memory_space<vmem>>, %arg4: memref<256x128xbf16, #tpu.memory_space<vmem>>, %arg5: memref<4x256xf32, #tpu.memory_space<vmem>>, %arg6: memref<128x128xf32, #tpu.memory_space<vmem>>, %arg7: memref<128x256xbf16, #tpu.memory_space<vmem>>, %arg8: memref<256x128xbf16, #tpu.memory_space<vmem>>, %arg9: memref<4x256xf32, #tpu.memory_space<vmem>>, %arg10: memref<128x128xf32, #tpu.memory_space<vmem>>, %arg11: memref<2x128xf32, #tpu.memory_space<vmem>>) attributes {dimension_semantics = [#tpu.dimension_semantics<parallel>], iteration_bounds = array<i64: 1>, scalar_prefetch = 0 : i64, scratch_operands = 0 : i64, tpu.core_type = #tpu.core_type<tc>, window_params = [{transform_indices = @transform_0, window_bounds = array<i64: 2, 256>}, {pipeline_mode = #tpu.pipeline_mode<synchronous>, transform_indices = @transform_1, window_bounds = array<i64: 256, 256>}, {pipeline_mode = #tpu.pipeline_mode<synchronous>, transform_indices = @transform_2, window_bounds = array<i64: 256, 128>}, {pipeline_mode = #tpu.pipeline_mode<synchronous>, transform_indices = @transform_3, window_bounds = array<i64: 256, 128>}, {pipeline_mode = #tpu.pipeline_mode<synchronous>, transform_indices = @transform_4, window_bounds = array<i64: 4, 256>}, {pipeline_mode = #tpu.pipeline_mode<synchronous>, transform_indices = @transform_5, window_bounds = array<i64: 128, 128>}, {pipeline_mode = #tpu.pipeline_mode<synchronous>, transform_indices = @transform_6, window_bounds = array<i64: 128, 256>}, {pipeline_mode = #tpu.pipeline_mode<synchronous>, transform_indices = @transform_7, window_bounds = array<i64: 256, 128>}, {pipeline_mode = #tpu.pipeline_mode<synchronous>, transform_indices = @transform_8, window_bounds = array<i64: 4, 256>}, {pipeline_mode = #tpu.pipeline_mode<synchronous>, transform_indices = @transform_9, window_bounds = array<i64: 128, 128>}, {transform_indices = @transform_10, window_bounds = array<i64: 2, 128>}]} {
    %c0 = arith.constant 0 : index
    %c0_0 = arith.constant 0 : index
    %0 = vector.load %arg1[%c0, %c0_0] : memref<2x256xf32, #tpu.memory_space<vmem>>, vector<2x256xf32>
    %c0_1 = arith.constant 0 : index
    %c0_2 = arith.constant 0 : index
    %1 = vector.load %arg2[%c0_1, %c0_2] : memref<256x256xbf16, #tpu.memory_space<vmem>>, vector<256x256xbf16>
    %c0_3 = arith.constant 0 : index
    %c0_4 = arith.constant 0 : index
    %2 = vector.load %arg3[%c0_3, %c0_4] : memref<256x128xbf16, #tpu.memory_space<vmem>>, vector<256x128xbf16>
    %c0_5 = arith.constant 0 : index
    %c0_6 = arith.constant 0 : index
    %3 = vector.load %arg4[%c0_5, %c0_6] : memref<256x128xbf16, #tpu.memory_space<vmem>>, vector<256x128xbf16>
    %c0_7 = arith.constant 0 : index
    %c0_8 = arith.constant 0 : index
    %4 = vector.load %arg6[%c0_7, %c0_8] : memref<128x128xf32, #tpu.memory_space<vmem>>, vector<128x128xf32>
    %c0_9 = arith.constant 0 : index
    %c0_10 = arith.constant 0 : index
    %5 = vector.load %arg5[%c0_9, %c0_10] : memref<4x256xf32, #tpu.memory_space<vmem>>, vector<1x256xf32>
    %c1 = arith.constant 1 : index
    %c0_11 = arith.constant 0 : index
    %6 = vector.load %arg5[%c1, %c0_11] : memref<4x256xf32, #tpu.memory_space<vmem>>, vector<1x128xf32>
    %c2 = arith.constant 2 : index
    %c0_12 = arith.constant 0 : index
    %7 = vector.load %arg5[%c2, %c0_12] : memref<4x256xf32, #tpu.memory_space<vmem>>, vector<1x128xf32>
    %c3 = arith.constant 3 : index
    %c0_13 = arith.constant 0 : index
    %8 = vector.load %arg5[%c3, %c0_13] : memref<4x256xf32, #tpu.memory_space<vmem>>, vector<1x128xf32>
    %9 = arith.truncf %0 : vector<2x256xf32> to vector<2x256xbf16>
    %cst = arith.constant dense<0.000000e+00> : vector<2x256xf32>
    %10 = tpu.matmul %9, %1, %cst {dimension_numbers = #tpu.dot_dimension_numbers<[1], [0], [0], [1], [0, 0, 1, 1], [], []>} : vector<2x256xbf16>, vector<256x256xbf16>, vector<2x256xf32> -> vector<2x256xf32>
    %11 = vector.broadcast %5 : vector<1x256xf32> to vector<2x256xf32>
    %12 = arith.addf %10, %11 : vector<2x256xf32>
    %cst_14 = arith.constant 0.000000e+00 : f32
    %13 = vector.broadcast %cst_14 : f32 to vector<2x256xf32>
    %14 = arith.maximumf %12, %13 : vector<2x256xf32>
    %15 = arith.truncf %14 : vector<2x256xf32> to vector<2x256xbf16>
    %cst_15 = arith.constant dense<0.000000e+00> : vector<2x128xf32>
    %16 = tpu.matmul %15, %2, %cst_15 {dimension_numbers = #tpu.dot_dimension_numbers<[1], [0], [0], [1], [0, 0, 1, 1], [], []>} : vector<2x256xbf16>, vector<256x128xbf16>, vector<2x128xf32> -> vector<2x128xf32>
    %cst_16 = arith.constant dense<0.000000e+00> : vector<2x128xf32>
    %17 = tpu.matmul %9, %3, %cst_16 {dimension_numbers = #tpu.dot_dimension_numbers<[1], [0], [0], [1], [0, 0, 1, 1], [], []>} : vector<2x256xbf16>, vector<256x128xbf16>, vector<2x128xf32> -> vector<2x128xf32>
    %18 = arith.addf %16, %17 : vector<2x128xf32>
    %19 = vector.broadcast %6 : vector<1x128xf32> to vector<2x128xf32>
    %20 = arith.addf %18, %19 : vector<2x128xf32>
    %cst_17 = arith.constant dense<0.000000e+00> : vector<2x128xf32>
    %21 = tpu.matmul %20, %4, %cst_17 {dimension_numbers = #tpu.dot_dimension_numbers<[1], [0], [0], [1], [0, 0, 1, 1], [], []>} : vector<2x128xf32>, vector<128x128xf32>, vector<2x128xf32> -> vector<2x128xf32>
    %22 = arith.subf %20, %21 : vector<2x128xf32>
    %23 = arith.mulf %22, %22 : vector<2x128xf32>
    %cst_18 = arith.constant dense<0.000000e+00> : vector<2x128xf32>
    %24 = tpu.matmul %23, %4, %cst_18 {dimension_numbers = #tpu.dot_dimension_numbers<[1], [0], [0], [1], [0, 0, 1, 1], [], []>} : vector<2x128xf32>, vector<128x128xf32>, vector<2x128xf32> -> vector<2x128xf32>
    %cst_19 = arith.constant 9.99999974E-6 : f32
    %25 = vector.broadcast %cst_19 : f32 to vector<2x128xf32>
    %26 = arith.addf %24, %25 : vector<2x128xf32>
    %27 = math.rsqrt %26 : vector<2x128xf32>
    %28 = vector.broadcast %7 : vector<1x128xf32> to vector<2x128xf32>
    %29 = arith.mulf %27, %28 : vector<2x128xf32>
    %30 = arith.mulf %22, %29 : vector<2x128xf32>
    %31 = vector.broadcast %8 : vector<1x128xf32> to vector<2x128xf32>
    %32 = arith.addf %30, %31 : vector<2x128xf32>
    %c0_20 = arith.constant 0 : index
    %c0_21 = arith.constant 0 : index
    %33 = vector.load %arg7[%c0_20, %c0_21] : memref<128x256xbf16, #tpu.memory_space<vmem>>, vector<128x256xbf16>
    %c0_22 = arith.constant 0 : index
    %c0_23 = arith.constant 0 : index
    %34 = vector.load %arg8[%c0_22, %c0_23] : memref<256x128xbf16, #tpu.memory_space<vmem>>, vector<256x128xbf16>
    %c0_24 = arith.constant 0 : index
    %c0_25 = arith.constant 0 : index
    %35 = vector.load %arg10[%c0_24, %c0_25] : memref<128x128xf32, #tpu.memory_space<vmem>>, vector<128x128xf32>
    %c0_26 = arith.constant 0 : index
    %c0_27 = arith.constant 0 : index
    %36 = vector.load %arg9[%c0_26, %c0_27] : memref<4x256xf32, #tpu.memory_space<vmem>>, vector<1x256xf32>
    %c1_28 = arith.constant 1 : index
    %c0_29 = arith.constant 0 : index
    %37 = vector.load %arg9[%c1_28, %c0_29] : memref<4x256xf32, #tpu.memory_space<vmem>>, vector<1x128xf32>
    %c2_30 = arith.constant 2 : index
    %c0_31 = arith.constant 0 : index
    %38 = vector.load %arg9[%c2_30, %c0_31] : memref<4x256xf32, #tpu.memory_space<vmem>>, vector<1x128xf32>
    %c3_32 = arith.constant 3 : index
    %c0_33 = arith.constant 0 : index
    %39 = vector.load %arg9[%c3_32, %c0_33] : memref<4x256xf32, #tpu.memory_space<vmem>>, vector<1x128xf32>
    %40 = arith.truncf %32 : vector<2x128xf32> to vector<2x128xbf16>
    %cst_34 = arith.constant dense<0.000000e+00> : vector<2x256xf32>
    %41 = tpu.matmul %40, %33, %cst_34 {dimension_numbers = #tpu.dot_dimension_numbers<[1], [0], [0], [1], [0, 0, 1, 1], [], []>} : vector<2x128xbf16>, vector<128x256xbf16>, vector<2x256xf32> -> vector<2x256xf32>
    %42 = vector.broadcast %36 : vector<1x256xf32> to vector<2x256xf32>
    %43 = arith.addf %41, %42 : vector<2x256xf32>
    %cst_35 = arith.constant 0.000000e+00 : f32
    %44 = vector.broadcast %cst_35 : f32 to vector<2x256xf32>
    %45 = arith.maximumf %43, %44 : vector<2x256xf32>
    %46 = arith.truncf %45 : vector<2x256xf32> to vector<2x256xbf16>
    %cst_36 = arith.constant dense<0.000000e+00> : vector<2x128xf32>
    %47 = tpu.matmul %46, %34, %cst_36 {dimension_numbers = #tpu.dot_dimension_numbers<[1], [0], [0], [1], [0, 0, 1, 1], [], []>} : vector<2x256xbf16>, vector<256x128xbf16>, vector<2x128xf32> -> vector<2x128xf32>
    %48 = arith.addf %47, %32 : vector<2x128xf32>
    %49 = vector.broadcast %37 : vector<1x128xf32> to vector<2x128xf32>
    %50 = arith.addf %48, %49 : vector<2x128xf32>
    %cst_37 = arith.constant dense<0.000000e+00> : vector<2x128xf32>
    %51 = tpu.matmul %50, %35, %cst_37 {dimension_numbers = #tpu.dot_dimension_numbers<[1], [0], [0], [1], [0, 0, 1, 1], [], []>} : vector<2x128xf32>, vector<128x128xf32>, vector<2x128xf32> -> vector<2x128xf32>
    %52 = arith.subf %50, %51 : vector<2x128xf32>
    %53 = arith.mulf %52, %52 : vector<2x128xf32>
    %cst_38 = arith.constant dense<0.000000e+00> : vector<2x128xf32>
    %54 = tpu.matmul %53, %35, %cst_38 {dimension_numbers = #tpu.dot_dimension_numbers<[1], [0], [0], [1], [0, 0, 1, 1], [], []>} : vector<2x128xf32>, vector<128x128xf32>, vector<2x128xf32> -> vector<2x128xf32>
    %cst_39 = arith.constant 9.99999974E-6 : f32
    %55 = vector.broadcast %cst_39 : f32 to vector<2x128xf32>
    %56 = arith.addf %54, %55 : vector<2x128xf32>
    %57 = math.rsqrt %56 : vector<2x128xf32>
    %58 = vector.broadcast %38 : vector<1x128xf32> to vector<2x128xf32>
    %59 = arith.mulf %57, %58 : vector<2x128xf32>
    %60 = arith.mulf %52, %59 : vector<2x128xf32>
    %61 = vector.broadcast %39 : vector<1x128xf32> to vector<2x128xf32>
    %62 = arith.addf %60, %61 : vector<2x128xf32>
    %c0_40 = arith.constant 0 : index
    %c0_41 = arith.constant 0 : index
    %63 = vector.load %arg11[%c0_40, %c0_41] : memref<2x128xf32, #tpu.memory_space<vmem>>, vector<2x128xf32>
    tpu.vector_store %arg11[%c0_40, %c0_41], %62 {strides = array<i32>} : memref<2x128xf32, #tpu.memory_space<vmem>>, vector<2x128xf32>,
    return
  }
  func.func @transform_0(%arg0: i32) -> (i32, i32) {
    %c0_i32 = arith.constant 0 : i32
    %c0_i32_0 = arith.constant 0 : i32
    return %arg0, %c0_i32 : i32, i32
  }
  func.func @transform_1(%arg0: i32) -> (i32, i32) {
    %c0_i32 = arith.constant 0 : i32
    %c0_i32_0 = arith.constant 0 : i32
    %c0_i32_1 = arith.constant 0 : i32
    return %c0_i32, %c0_i32_0 : i32, i32
  }
  func.func @transform_2(%arg0: i32) -> (i32, i32) {
    %c0_i32 = arith.constant 0 : i32
    %c0_i32_0 = arith.constant 0 : i32
    %c0_i32_1 = arith.constant 0 : i32
    return %c0_i32, %c0_i32_0 : i32, i32
  }
  func.func @transform_3(%arg0: i32) -> (i32, i32) {
    %c0_i32 = arith.constant 0 : i32
    %c0_i32_0 = arith.constant 0 : i32
    %c0_i32_1 = arith.constant 0 : i32
    return %c0_i32, %c0_i32_0 : i32, i32
  }
  func.func @transform_4(%arg0: i32) -> (i32, i32) {
    %c0_i32 = arith.constant 0 : i32
    %c0_i32_0 = arith.constant 0 : i32
    %c0_i32_1 = arith.constant 0 : i32
    return %c0_i32, %c0_i32_0 : i32, i32
  }
  func.func @transform_5(%arg0: i32) -> (i32, i32) {
    %c0_i32 = arith.constant 0 : i32
    %c0_i32_0 = arith.constant 0 : i32
    %c0_i32_1 = arith.constant 0 : i32
    return %c0_i32, %c0_i32_0 : i32, i32
  }
  func.func @transform_6(%arg0: i32) -> (i32, i32) {
    %c0_i32 = arith.constant 0 : i32
    %c0_i32_0 = arith.constant 0 : i32
    %c0_i32_1 = arith.constant 0 : i32
    return %c0_i32, %c0_i32_0 : i32, i32
  }
  func.func @transform_7(%arg0: i32) -> (i32, i32) {
    %c0_i32 = arith.constant 0 : i32
    %c0_i32_0 = arith.constant 0 : i32
    %c0_i32_1 = arith.constant 0 : i32
    return %c0_i32, %c0_i32_0 : i32, i32
  }
  func.func @transform_8(%arg0: i32) -> (i32, i32) {
    %c0_i32 = arith.constant 0 : i32
    %c0_i32_0 = arith.constant 0 : i32
    %c0_i32_1 = arith.constant 0 : i32
    return %c0_i32, %c0_i32_0 : i32, i32
  }
  func.func @transform_9(%arg0: i32) -> (i32, i32) {
    %c0_i32 = arith.constant 0 : i32
    %c0_i32_0 = arith.constant 0 : i32
    %c0_i32_1 = arith.constant 0 : i32
    return %c0_i32, %c0_i32_0 : i32, i32
  }
  func.func @transform_10(%arg0: i32) -> (i32, i32) {
    %c0_i32 = arith.constant 0 : i32
    %c0_i32_0 = arith.constant 0 : i32
    return %arg0, %c0_i32 : i32, i32
  }
}

</mosaic_0001>

<llo_original>
// kernel: tpu_custom_call.1
$region0: #{tpu_custom_call.1}
  #allocation0 [shape = 'u32[]', space=smem, size = 0x4, offset = 0x4, fixed_abs, tag = 'smem constant byte address 0x4 - core index']
  #allocation1 [shape = 'u32[72,128]{1,0:T(1,128)}', space=vmem, size = 0x9000, scoped, tag = 'internal scratch']
  %s0 = inlined_call_operand.hbm [shape: f32[2,256], index: 0, kind: input, shape index: {}]
  %s1 = inlined_call_operand.hbm [shape: bf16[256,256], index: 1, kind: input, shape index: {}]
  %s2 = inlined_call_operand.hbm [shape: bf16[256,128], index: 2, kind: input, shape index: {}]
  %s3 = inlined_call_operand.hbm [shape: bf16[256,128], index: 3, kind: input, shape index: {}]
  %s4 = inlined_call_operand.hbm [shape: f32[4,256], index: 4, kind: input, shape index: {}]
  %s5 = inlined_call_operand.hbm [shape: f32[128,128], index: 5, kind: input, shape index: {}]
  %s6 = inlined_call_operand.hbm [shape: bf16[128,256], index: 6, kind: input, shape index: {}]
  %s7 = inlined_call_operand.hbm [shape: bf16[256,128], index: 7, kind: input, shape index: {}]
  %s8 = inlined_call_operand.hbm [shape: f32[4,256], index: 8, kind: input, shape index: {}]
  %s9 = inlined_call_operand.hbm [shape: f32[128,128], index: 9, kind: input, shape index: {}]
  %s10 = inlined_call_operand.hbm [shape: f32[2,128], index: 10, kind: output, shape index: {}]
  %s11 = sld [smem:[#allocation0]]
  $region90: #{tpu_custom_call.1} parent=0
    _
  %s13 = ssub.s32 1, %s11
  %s14 = scalar_select 0, %s13, %s11
  $region1: #{tpu_custom_call.1} parent=0
    #allocation2 [shape = 'u8[2048]{0}', space=vmem, size = 0x800, scoped, tag = 'input window, operand 0, single buffered']
    #allocation3 [shape = 's32[1]{0}', space=sflag, size = 0x4, scoped, tag = 'scoped memory for tpu_custom_call.1']
    #allocation4 [shape = 's32[1]{0}', space=sflag, size = 0x4, scoped, tag = 'scoped memory for tpu_custom_call.1']
    #allocation5 [shape = 'u8[131072]{0}', space=vmem, size = 0x20000, scoped, tag = 'input window, operand 1, single buffered']
    #allocation6 [shape = 's32[1]{0}', space=sflag, size = 0x4, scoped, tag = 'scoped memory for tpu_custom_call.1']
    #allocation7 [shape = 'u8[65536]{0}', space=vmem, size = 0x10000, scoped, tag = 'input window, operand 2, single buffered']
    #allocation8 [shape = 'u8[65536]{0}', space=vmem, size = 0x10000, scoped, tag = 'input window, operand 3, single buffered']
    #allocation9 [shape = 's32[1]{0}', space=sflag, size = 0x4, scoped, tag = 'scoped memory for tpu_custom_call.1']
    #allocation10 [shape = 'u8[4096]{0}', space=vmem, size = 0x1000, scoped, tag = 'input window, operand 4, single buffered']
    #allocation11 [shape = 'u8[65536]{0}', space=vmem, size = 0x10000, scoped, tag = 'input window, operand 5, single buffered']
    #allocation12 [shape = 's32[1]{0}', space=sflag, size = 0x4, scoped, tag = 'scoped memory for tpu_custom_call.1']
    #allocation13 [shape = 'u8[65536]{0}', space=vmem, size = 0x10000, scoped, tag = 'input window, operand 6, single buffered']
    #allocation14 [shape = 'u8[65536]{0}', space=vmem, size = 0x10000, scoped, tag = 'input window, operand 7, single buffered']
    #allocation15 [shape = 's32[1]{0}', space=sflag, size = 0x4, scoped, tag = 'scoped memory for tpu_custom_call.1']
    #allocation16 [shape = 'u8[4096]{0}', space=vmem, size = 0x1000, scoped, tag = 'input window, operand 8, single buffered']
    #allocation17 [shape = 'u8[65536]{0}', space=vmem, size = 0x10000, scoped, tag = 'input window, operand 9, single buffered']
    #allocation18 [shape = 's32[1]{0}', space=sflag, size = 0x4, scoped, tag = 'scoped memory for tpu_custom_call.1']
    #allocation19 [shape = 'u8[1024]{0}', space=vmem, size = 0x400, scoped, tag = 'output window, operand 0, single buffered']
    %15 = vsyncpa [#allocation3], 0
    %16 = vsyncpa [#allocation6], 0
    %17 = vsyncpa [#allocation9], 0
    %18 = vsyncpa [#allocation12], 0
    %19 = vsyncpa [#allocation15], 0
    %20 = vsyncpa [#allocation18], 0
    %21 = vsyncpa [#allocation4], 0
    // Predicated region
    $region2: #{tpu_custom_call.1} parent=1 // pred_check
      _
    $region3: #{tpu_custom_call.1} parent=1 // pred_check_branch
      %23 = sbr.rel (0) target = $region5
    $region4: #{tpu_custom_call.1} parent=1 // pred_region
      %25 = vsyncadd [#allocation3], 0
      %s27 = sshll.u32 %s0, 4
      %s28 = int_to_ptr.hbm [resolvable:$true] %s27
      %s29 = sshll.u32 [#allocation2], 4
      %s30 = int_to_ptr.vmem [resolvable:$true] %s29
      %32 = dma.hbm_to_vmem [thread:$0]  %s28, 64, %s30, [#allocation3]
    $region5: #{tpu_custom_call.1} parent=1 // pred_fallthru
      _
    // Predicated region
    $region6: #{tpu_custom_call.1} parent=1 // pred_check
      _
    $region7: #{tpu_custom_call.1} parent=1 // pred_check_branch
      %34 = sbr.rel (0) target = $region9
    $region8: #{tpu_custom_call.1} parent=1 // pred_region
      %36 = vsyncadd [#allocation6], 0
      %s37 = sshll.u32 %s1, 4
      %s38 = int_to_ptr.hbm [resolvable:$true] %s37
      %s39 = sshll.u32 [#allocation5], 4
      %s40 = int_to_ptr.vmem [resolvable:$true] %s39
      %45 = dma.hbm_to_vmem [thread:$0]  %s38, 4096, %s40, [#allocation6], 128, 128, 8
    $region9: #{tpu_custom_call.1} parent=1 // pred_fallthru
      _
    // Predicated region
    $region10: #{tpu_custom_call.1} parent=1 // pred_check
      _
    $region11: #{tpu_custom_call.1} parent=1 // pred_check_branch
      %47 = sbr.rel (0) target = $region13
    $region12: #{tpu_custom_call.1} parent=1 // pred_region
      %49 = vsyncadd [#allocation6], 0
      %s50 = sshll.u32 %s2, 4
      %s51 = int_to_ptr.hbm [resolvable:$true] %s50
      %s52 = sshll.u32 [#allocation7], 4
      %s53 = int_to_ptr.vmem [resolvable:$true] %s52
      %58 = dma.hbm_to_vmem [thread:$0]  %s51, 2048, %s53, [#allocation6], 64, 64, 4
    $region13: #{tpu_custom_call.1} parent=1 // pred_fallthru
      _
    // Predicated region
    $region14: #{tpu_custom_call.1} parent=1 // pred_check
      _
    $region15: #{tpu_custom_call.1} parent=1 // pred_check_branch
      %60 = sbr.rel (0) target = $region17
    $region16: #{tpu_custom_call.1} parent=1 // pred_region
      %62 = vsyncadd [#allocation9], 0
      %s63 = sshll.u32 %s3, 4
      %s64 = int_to_ptr.hbm [resolvable:$true] %s63
      %s65 = sshll.u32 [#allocation8], 4
      %s66 = int_to_ptr.vmem [resolvable:$true] %s65
      %71 = dma.hbm_to_vmem [thread:$0]  %s64, 2048, %s66, [#allocation9], 64, 64, 4
    $region17: #{tpu_custom_call.1} parent=1 // pred_fallthru
      _
    // Predicated region
    $region18: #{tpu_custom_call.1} parent=1 // pred_check
      _
    $region19: #{tpu_custom_call.1} parent=1 // pred_check_branch
      %73 = sbr.rel (0) target = $region21
    $region20: #{tpu_custom_call.1} parent=1 // pred_region
      %75 = vsyncadd [#allocation9], 0
      %s77 = sshll.u32 %s4, 4
      %s78 = int_to_ptr.hbm [resolvable:$true] %s77
      %s79 = sshll.u32 [#allocation10], 4
      %s80 = int_to_ptr.vmem [resolvable:$true] %s79
      %82 = dma.hbm_to_vmem [thread:$0]  %s78, 128, %s80, [#allocation9]
    $region21: #{tpu_custom_call.1} parent=1 // pred_fallthru
      _
    // Predicated region
    $region22: #{tpu_custom_call.1} parent=1 // pred_check
      _
    $region23: #{tpu_custom_call.1} parent=1 // pred_check_branch
      %84 = sbr.rel (0) target = $region25
    $region24: #{tpu_custom_call.1} parent=1 // pred_region
      %86 = vsyncadd [#allocation12], 0
      %s87 = sshll.u32 %s5, 4
      %s88 = int_to_ptr.hbm [resolvable:$true] %s87
      %s89 = sshll.u32 [#allocation11], 4
      %s90 = int_to_ptr.vmem [resolvable:$true] %s89
      %95 = dma.hbm_to_vmem [thread:$0]  %s88, 2048, %s90, [#allocation12], 128, 128, 8
    $region25: #{tpu_custom_call.1} parent=1 // pred_fallthru
      _
    // Predicated region
    $region26: #{tpu_custom_call.1} parent=1 // pred_check
      _
    $region27: #{tpu_custom_call.1} parent=1 // pred_check_branch
      %97 = sbr.rel (0) target = $region29
    $region28: #{tpu_custom_call.1} parent=1 // pred_region
      %99 = vsyncadd [#allocation12], 0
      %s100 = sshll.u32 %s6, 4
      %s101 = int_to_ptr.hbm [resolvable:$true] %s100
      %s102 = sshll.u32 [#allocation13], 4
      %s103 = int_to_ptr.vmem [resolvable:$true] %s102
      %108 = dma.hbm_to_vmem [thread:$0]  %s101, 2048, %s103, [#allocation12], 128, 128, 8
    $region29: #{tpu_custom_call.1} parent=1 // pred_fallthru
      _
    // Predicated region
    $region30: #{tpu_custom_call.1} parent=1 // pred_check
      _
    $region31: #{tpu_custom_call.1} parent=1 // pred_check_branch
      %110 = sbr.rel (0) target = $region33
    $region32: #{tpu_custom_call.1} parent=1 // pred_region
      %112 = vsyncadd [#allocation15], 0
      %s113 = sshll.u32 %s7, 4
      %s114 = int_to_ptr.hbm [resolvable:$true] %s113
      %s115 = sshll.u32 [#allocation14], 4
      %s116 = int_to_ptr.vmem [resolvable:$true] %s115
      %121 = dma.hbm_to_vmem [thread:$0]  %s114, 2048, %s116, [#allocation15], 64, 64, 4
    $region33: #{tpu_custom_call.1} parent=1 // pred_fallthru
      _
    // Predicated region
    $region34: #{tpu_custom_call.1} parent=1 // pred_check
      _
    $region35: #{tpu_custom_call.1} parent=1 // pred_check_branch
      %123 = sbr.rel (0) target = $region37
    $region36: #{tpu_custom_call.1} parent=1 // pred_region
      %125 = vsyncadd [#allocation15], 0
      %s127 = sshll.u32 %s8, 4
      %s128 = int_to_ptr.hbm [resolvable:$true] %s127
      %s129 = sshll.u32 [#allocation16], 4
      %s130 = int_to_ptr.vmem [resolvable:$true] %s129
      %132 = dma.hbm_to_vmem [thread:$0]  %s128, 128, %s130, [#allocation15]
    $region37: #{tpu_custom_call.1} parent=1 // pred_fallthru
      _
    // Predicated region
    $region38: #{tpu_custom_call.1} parent=1 // pred_check
      _
    $region39: #{tpu_custom_call.1} parent=1 // pred_check_branch
      %134 = sbr.rel (0) target = $region41
    $region40: #{tpu_custom_call.1} parent=1 // pred_region
      %136 = vsyncadd [#allocation18], 0
      %s137 = sshll.u32 %s9, 4
      %s138 = int_to_ptr.hbm [resolvable:$true] %s137
      %s139 = sshll.u32 [#allocation17], 4
      %s140 = int_to_ptr.vmem [resolvable:$true] %s139
      %145 = dma.hbm_to_vmem [thread:$0]  %s138, 2048, %s140, [#allocation18], 128, 128, 8
    $region41: #{tpu_custom_call.1} parent=1 // pred_fallthru
      _
    // Predicated region
    $region42: #{tpu_custom_call.1} parent=1 // pred_check
      _
    $region43: #{tpu_custom_call.1} parent=1 // pred_check_branch
      %147 = sbr.rel (0) target = $region45
    $region44: #{tpu_custom_call.1} parent=1 // pred_region
      %149 = dma.done [#allocation3], 64
    $region45: #{tpu_custom_call.1} parent=1 // pred_fallthru
      _
    // Predicated region
    $region46: #{tpu_custom_call.1} parent=1 // pred_check
      _
    $region47: #{tpu_custom_call.1} parent=1 // pred_check_branch
      %151 = sbr.rel (0) target = $region49
    $region48: #{tpu_custom_call.1} parent=1 // pred_region
      %153 = dma.done [#allocation6], 4096
    $region49: #{tpu_custom_call.1} parent=1 // pred_fallthru
      _
    // Predicated region
    $region50: #{tpu_custom_call.1} parent=1 // pred_check
      _
    $region51: #{tpu_custom_call.1} parent=1 // pred_check_branch
      %155 = sbr.rel (0) target = $region53
    $region52: #{tpu_custom_call.1} parent=1 // pred_region
      %157 = dma.done [#allocation6], 2048
    $region53: #{tpu_custom_call.1} parent=1 // pred_fallthru
      _
    // Predicated region
    $region54: #{tpu_custom_call.1} parent=1 // pred_check
      _
    $region55: #{tpu_custom_call.1} parent=1 // pred_check_branch
      %159 = sbr.rel (0) target = $region57
    $region56: #{tpu_custom_call.1} parent=1 // pred_region
      %161 = dma.done [#allocation9], 2048
    $region57: #{tpu_custom_call.1} parent=1 // pred_fallthru
      _
    // Predicated region
    $region58: #{tpu_custom_call.1} parent=1 // pred_check
      _
    $region59: #{tpu_custom_call.1} parent=1 // pred_check_branch
      %163 = sbr.rel (0) target = $region61
    $region60: #{tpu_custom_call.1} parent=1 // pred_region
      %165 = dma.done [#allocation9], 128
    $region61: #{tpu_custom_call.1} parent=1 // pred_fallthru
      _
    // Predicated region
    $region62: #{tpu_custom_call.1} parent=1 // pred_check
      _
    $region63: #{tpu_custom_call.1} parent=1 // pred_check_branch
      %167 = sbr.rel (0) target = $region65
    $region64: #{tpu_custom_call.1} parent=1 // pred_region
      %169 = dma.done [#allocation12], 2048
    $region65: #{tpu_custom_call.1} parent=1 // pred_fallthru
      _
    // Predicated region
    $region66: #{tpu_custom_call.1} parent=1 // pred_check
      _
    $region67: #{tpu_custom_call.1} parent=1 // pred_check_branch
      %171 = sbr.rel (0) target = $region69
    $region68: #{tpu_custom_call.1} parent=1 // pred_region
      %173 = dma.done [#allocation12], 2048
    $region69: #{tpu_custom_call.1} parent=1 // pred_fallthru
      _
    // Predicated region
    $region70: #{tpu_custom_call.1} parent=1 // pred_check
      _
    $region71: #{tpu_custom_call.1} parent=1 // pred_check_branch
      %175 = sbr.rel (0) target = $region73
    $region72: #{tpu_custom_call.1} parent=1 // pred_region
      %177 = dma.done [#allocation15], 2048
    $region73: #{tpu_custom_call.1} parent=1 // pred_fallthru
      _
    // Predicated region
    $region74: #{tpu_custom_call.1} parent=1 // pred_check
      _
    $region75: #{tpu_custom_call.1} parent=1 // pred_check_branch
      %179 = sbr.rel (0) target = $region77
    $region76: #{tpu_custom_call.1} parent=1 // pred_region
      %181 = dma.done [#allocation15], 128
    $region77: #{tpu_custom_call.1} parent=1 // pred_fallthru
      _
    // Predicated region
    $region78: #{tpu_custom_call.1} parent=1 // pred_check
      _
    $region79: #{tpu_custom_call.1} parent=1 // pred_check_branch
      %183 = sbr.rel (0) target = $region81
    $region80: #{tpu_custom_call.1} parent=1 // pred_region
      %185 = dma.done [#allocation18], 2048
    $region81: #{tpu_custom_call.1} parent=1 // pred_fallthru
      _
    %v186 = vld [vmem:[#allocation2] sm:$0xf]
    %v187 = vld [vmem:[#allocation5] sm:$0xff]
    %v188 = vld [vmem:[#allocation5 + $0x8] sm:$0xff]
    %v189 = vld [vmem:[#allocation5 + $0x10] sm:$0xff]
    %v190 = vld [vmem:[#allocation5 + $0x18] sm:$0xff]
    %v191 = vld [vmem:[#allocation5 + $0x20] sm:$0xff]
    %v192 = vld [vmem:[#allocation5 + $0x28] sm:$0xff]
    %v193 = vld [vmem:[#allocation5 + $0x30] sm:$0xff]
    %v194 = vld [vmem:[#allocation5 + $0x38] sm:$0xff]
    %v195 = vld [vmem:[#allocation5 + $0x40] sm:$0xff]
    %v196 = vld [vmem:[#allocation5 + $0x48] sm:$0xff]
    %v197 = vld [vmem:[#allocation5 + $0x50] sm:$0xff]
    %v198 = vld [vmem:[#allocation5 + $0x58] sm:$0xff]
    %v199 = vld [vmem:[#allocation5 + $0x60] sm:$0xff]
    %v200 = vld [vmem:[#allocation5 + $0x68] sm:$0xff]
    %v201 = vld [vmem:[#allocation5 + $0x70] sm:$0xff]
    %v202 = vld [vmem:[#allocation5 + $0x78] sm:$0xff]
    %v203 = vld [vmem:[#allocation5 + $0x80] sm:$0xff]
    %v204 = vld [vmem:[#allocation5 + $0x88] sm:$0xff]
    %v205 = vld [vmem:[#allocation5 + $0x90] sm:$0xff]
    %v206 = vld [vmem:[#allocation5 + $0x98] sm:$0xff]
    %v207 = vld [vmem:[#allocation5 + $0xa0] sm:$0xff]
    %v208 = vld [vmem:[#allocation5 + $0xa8] sm:$0xff]
    %v209 = vld [vmem:[#allocation5 + $0xb0] sm:$0xff]
    %v210 = vld [vmem:[#allocation5 + $0xb8] sm:$0xff]
    %v211 = vld [vmem:[#allocation5 + $0xc0] sm:$0xff]
    %v212 = vld [vmem:[#allocation5 + $0xc8] sm:$0xff]
    %v213 = vld [vmem:[#allocation5 + $0xd0] sm:$0xff]
    %v214 = vld [vmem:[#allocation5 + $0xd8] sm:$0xff]
    %v215 = vld [vmem:[#allocation5 + $0xe0] sm:$0xff]
    %v216 = vld [vmem:[#allocation5 + $0xe8] sm:$0xff]
    %v217 = vld [vmem:[#allocation5 + $0xf0] sm:$0xff]
    %v218 = vld [vmem:[#allocation5 + $0xf8] sm:$0xff]
    %v219 = vld [vmem:[#allocation7] sm:$0xf]
    %v220 = vld [vmem:[#allocation7 + $0x4] sm:$0xf]
    %v221 = vld [vmem:[#allocation7 + $0x8] sm:$0xf]
    %v222 = vld [vmem:[#allocation7 + $0xc] sm:$0xf]
    %v223 = vld [vmem:[#allocation7 + $0x10] sm:$0xf]
    %v224 = vld [vmem:[#allocation7 + $0x14] sm:$0xf]
    %v225 = vld [vmem:[#allocation7 + $0x18] sm:$0xf]
    %v226 = vld [vmem:[#allocation7 + $0x1c] sm:$0xf]
    %v227 = vld [vmem:[#allocation7 + $0x20] sm:$0xf]
    %v228 = vld [vmem:[#allocation7 + $0x24] sm:$0xf]
    %v229 = vld [vmem:[#allocation7 + $0x28] sm:$0xf]
    %v230 = vld [vmem:[#allocation7 + $0x2c] sm:$0xf]
    %v231 = vld [vmem:[#allocation7 + $0x30] sm:$0xf]
    %v232 = vld [vmem:[#allocation7 + $0x34] sm:$0xf]
    %v233 = vld [vmem:[#allocation7 + $0x38] sm:$0xf]
    %v234 = vld [vmem:[#allocation7 + $0x3c] sm:$0xf]
    %v235 = vld [vmem:[#allocation7 + $0x40] sm:$0xf]
    %v236 = vld [vmem:[#allocation7 + $0x44] sm:$0xf]
    %v237 = vld [vmem:[#allocation7 + $0x48] sm:$0xf]
    %v238 = vld [vmem:[#allocation7 + $0x4c] sm:$0xf]
    %v239 = vld [vmem:[#allocation7 + $0x50] sm:$0xf]
    %v240 = vld [vmem:[#allocation7 + $0x54] sm:$0xf]
    %v241 = vld [vmem:[#allocation7 + $0x58] sm:$0xf]
    %v242 = vld [vmem:[#allocation7 + $0x5c] sm:$0xf]
    %v243 = vld [vmem:[#allocation7 + $0x60] sm:$0xf]
    %v244 = vld [vmem:[#allocation7 + $0x64] sm:$0xf]
    %v245 = vld [vmem:[#allocation7 + $0x68] sm:$0xf]
    %v246 = vld [vmem:[#allocation7 + $0x6c] sm:$0xf]
    %v247 = vld [vmem:[#allocation7 + $0x70] sm:$0xf]
    %v248 = vld [vmem:[#allocation7 + $0x74] sm:$0xf]
    %v249 = vld [vmem:[#allocation7 + $0x78] sm:$0xf]
    %v250 = vld [vmem:[#allocation7 + $0x7c] sm:$0xf]
    %v251 = vld [vmem:[#allocation8] sm:$0xf]
    %v252 = vld [vmem:[#allocation8 + $0x4] sm:$0xf]
    %v253 = vld [vmem:[#allocation8 + $0x8] sm:$0xf]
    %v254 = vld [vmem:[#allocation8 + $0xc] sm:$0xf]
    %v255 = vld [vmem:[#allocation8 + $0x10] sm:$0xf]
    %v256 = vld [vmem:[#allocation8 + $0x14] sm:$0xf]
    %v257 = vld [vmem:[#allocation8 + $0x18] sm:$0xf]
    %v258 = vld [vmem:[#allocation8 + $0x1c] sm:$0xf]
    %v259 = vld [vmem:[#allocation8 + $0x20] sm:$0xf]
    %v260 = vld [vmem:[#allocation8 + $0x24] sm:$0xf]
    %v261 = vld [vmem:[#allocation8 + $0x28] sm:$0xf]
    %v262 = vld [vmem:[#allocation8 + $0x2c] sm:$0xf]
    %v263 = vld [vmem:[#allocation8 + $0x30] sm:$0xf]
    %v264 = vld [vmem:[#allocation8 + $0x34] sm:$0xf]
    %v265 = vld [vmem:[#allocation8 + $0x38] sm:$0xf]
    %v266 = vld [vmem:[#allocation8 + $0x3c] sm:$0xf]
    %v267 = vld [vmem:[#allocation8 + $0x40] sm:$0xf]
    %v268 = vld [vmem:[#allocation8 + $0x44] sm:$0xf]
    %v269 = vld [vmem:[#allocation8 + $0x48] sm:$0xf]
    %v270 = vld [vmem:[#allocation8 + $0x4c] sm:$0xf]
    %v271 = vld [vmem:[#allocation8 + $0x50] sm:$0xf]
    %v272 = vld [vmem:[#allocation8 + $0x54] sm:$0xf]
    %v273 = vld [vmem:[#allocation8 + $0x58] sm:$0xf]
    %v274 = vld [vmem:[#allocation8 + $0x5c] sm:$0xf]
    %v275 = vld [vmem:[#allocation8 + $0x60] sm:$0xf]
    %v276 = vld [vmem:[#allocation8 + $0x64] sm:$0xf]
    %v277 = vld [vmem:[#allocation8 + $0x68] sm:$0xf]
    %v278 = vld [vmem:[#allocation8 + $0x6c] sm:$0xf]
    %v279 = vld [vmem:[#allocation8 + $0x70] sm:$0xf]
    %v280 = vld [vmem:[#allocation8 + $0x74] sm:$0xf]
    %v281 = vld [vmem:[#allocation8 + $0x78] sm:$0xf]
    %v282 = vld [vmem:[#allocation8 + $0x7c] sm:$0xf]
    %v283 = vld [vmem:[#allocation11] sm:$0xff]
    %v284 = vld [vmem:[#allocation11 + $0x8] sm:$0xff]
    %v285 = vld [vmem:[#allocation11 + $0x10] sm:$0xff]
    %v286 = vld [vmem:[#allocation11 + $0x18] sm:$0xff]
    %v287 = vld [vmem:[#allocation11 + $0x20] sm:$0xff]
    %v288 = vld [vmem:[#allocation11 + $0x28] sm:$0xff]
    %v289 = vld [vmem:[#allocation11 + $0x30] sm:$0xff]
    %v290 = vld [vmem:[#allocation11 + $0x38] sm:$0xff]
    %v291 = vld [vmem:[#allocation11 + $0x40] sm:$0xff]
    %v292 = vld [vmem:[#allocation11 + $0x48] sm:$0xff]
    %v293 = vld [vmem:[#allocation11 + $0x50] sm:$0xff]
    %v294 = vld [vmem:[#allocation11 + $0x58] sm:$0xff]
    %v295 = vld [vmem:[#allocation11 + $0x60] sm:$0xff]
    %v296 = vld [vmem:[#allocation11 + $0x68] sm:$0xff]
    %v297 = vld [vmem:[#allocation11 + $0x70] sm:$0xff]
    %v298 = vld [vmem:[#allocation11 + $0x78] sm:$0xff]
    %v299 = vld [vmem:[#allocation10] ss:$4 sm:$0x3]
    %v300 = vld [vmem:[#allocation10 + $0x1] sm:$0x1]
    %v301 = vld [vmem:[#allocation10 + $0x2] sm:$0x1]
    %v302 = vld [vmem:[#allocation10 + $0x3] sm:$0x1]
    %304 = vst [vmem:[#allocation1] ss:$4 sm:$0xff] %v186
    %v305 = vld.sshfl [vmem:[#allocation1] sm:$0xff pattern:$0x73625140]
    %v306 = vld.sshfl [vmem:[#allocation1 + $0x8] sm:$0xff pattern:$0x73625140]
    %v309 = vpack.c.bf16 %v305, %v305
    %v310 = vpack.c.bf16 %v306, %v306
    %v312 = vperm.slane %v299, 0
    %v313 = vperm.slane %v299, 1
    %v348 = vunpack.c.l.b16 %v187
    %v349 = vunpack.c.h.b16 %v187
    %v350 = vunpack.c.l.b16 %v188
    %v351 = vunpack.c.h.b16 %v188
    %v352 = vunpack.c.l.b16 %v189
    %v353 = vunpack.c.h.b16 %v189
    %v354 = vunpack.c.l.b16 %v190
    %v355 = vunpack.c.h.b16 %v190
    %v356 = vunpack.c.l.b16 %v191
    %v357 = vunpack.c.h.b16 %v191
    %v358 = vunpack.c.l.b16 %v192
    %v359 = vunpack.c.h.b16 %v192
    %v360 = vunpack.c.l.b16 %v193
    %v361 = vunpack.c.h.b16 %v193
    %v362 = vunpack.c.l.b16 %v194
    %v363 = vunpack.c.h.b16 %v194
    %v364 = vunpack.c.l.b16 %v195
    %v365 = vunpack.c.h.b16 %v195
    %v366 = vunpack.c.l.b16 %v196
    %v367 = vunpack.c.h.b16 %v196
    %v368 = vunpack.c.l.b16 %v197
    %v369 = vunpack.c.h.b16 %v197
    %v370 = vunpack.c.l.b16 %v198
    %v371 = vunpack.c.h.b16 %v198
    %v372 = vunpack.c.l.b16 %v199
    %v373 = vunpack.c.h.b16 %v199
    %v374 = vunpack.c.l.b16 %v200
    %v375 = vunpack.c.h.b16 %v200
    %v376 = vunpack.c.l.b16 %v201
    %v377 = vunpack.c.h.b16 %v201
    %v378 = vunpack.c.l.b16 %v202
    %v379 = vunpack.c.h.b16 %v202
    %v380 = vunpack.c.l.b16 %v203
    %v381 = vunpack.c.h.b16 %v203
    %v382 = vunpack.c.l.b16 %v204
    %v383 = vunpack.c.h.b16 %v204
    %v384 = vunpack.c.l.b16 %v205
    %v385 = vunpack.c.h.b16 %v205
    %v386 = vunpack.c.l.b16 %v206
    %v387 = vunpack.c.h.b16 %v206
    %v388 = vunpack.c.l.b16 %v207
    %v389 = vunpack.c.h.b16 %v207
    %v390 = vunpack.c.l.b16 %v208
    %v391 = vunpack.c.h.b16 %v208
    %v392 = vunpack.c.l.b16 %v209
    %v393 = vunpack.c.h.b16 %v209
    %v394 = vunpack.c.l.b16 %v210
    %v395 = vunpack.c.h.b16 %v210
    %v396 = vunpack.c.l.b16 %v211
    %v397 = vunpack.c.h.b16 %v211
    %v398 = vunpack.c.l.b16 %v212
    %v399 = vunpack.c.h.b16 %v212
    %v400 = vunpack.c.l.b16 %v213
    %v401 = vunpack.c.h.b16 %v213
    %v402 = vunpack.c.l.b16 %v214
    %v403 = vunpack.c.h.b16 %v214
    %v404 = vunpack.c.l.b16 %v215
    %v405 = vunpack.c.h.b16 %v215
    %v406 = vunpack.c.l.b16 %v216
    %v407 = vunpack.c.h.b16 %v216
    %v408 = vunpack.c.l.b16 %v217
    %v409 = vunpack.c.h.b16 %v217
    %v410 = vunpack.c.l.b16 %v218
    %v411 = vunpack.c.h.b16 %v218
    %v412 = vpack.c.b16 %v350, %v348
    %v413 = vpack.c.b16 %v351, %v349
    %v414 = vpack.c.b16 %v354, %v352
    %v415 = vpack.c.b16 %v355, %v353
    %v416 = vpack.c.b16 %v358, %v356
    %v417 = vpack.c.b16 %v359, %v357
    %v418 = vpack.c.b16 %v362, %v360
    %v419 = vpack.c.b16 %v363, %v361
    %v420 = vpack.c.b16 %v366, %v364
    %v421 = vpack.c.b16 %v367, %v365
    %v422 = vpack.c.b16 %v370, %v368
    %v423 = vpack.c.b16 %v371, %v369
    %v424 = vpack.c.b16 %v374, %v372
    %v425 = vpack.c.b16 %v375, %v373
    %v426 = vpack.c.b16 %v378, %v376
    %v427 = vpack.c.b16 %v379, %v377
    %v428 = vpack.c.b16 %v382, %v380
    %v429 = vpack.c.b16 %v383, %v381
    %v430 = vpack.c.b16 %v386, %v384
    %v431 = vpack.c.b16 %v387, %v385
    %v432 = vpack.c.b16 %v390, %v388
    %v433 = vpack.c.b16 %v391, %v389
    %v434 = vpack.c.b16 %v394, %v392
    %v435 = vpack.c.b16 %v395, %v393
    %v436 = vpack.c.b16 %v398, %v396
    %v437 = vpack.c.b16 %v399, %v397
    %v438 = vpack.c.b16 %v402, %v400
    %v439 = vpack.c.b16 %v403, %v401
    %v440 = vpack.c.b16 %v406, %v404
    %v441 = vpack.c.b16 %v407, %v405
    %v442 = vpack.c.b16 %v410, %v408
    %v443 = vpack.c.b16 %v411, %v409
    %476 = vmatpush.bf16.msra.mxu0 %v426
    %477 = vmatpush.bf16.msra.mxu0 %v424
    %478 = vmatpush.bf16.msra.mxu0 %v422
    %479 = vmatpush.bf16.msra.mxu0 %v420
    %480 = vmatpush.bf16.msra.mxu0 %v418
    %481 = vmatpush.bf16.msra.mxu0 %v416
    %482 = vmatpush.bf16.msra.mxu0 %v414
    %483 = vmatpush.bf16.msra.mxu0 %v412
    %484 = vmatmul.bf16.gmra.mxu0 %v309
    %v485 = vpop.f32.mrf.mxu0
    %v486 = vadd.f32 %v312, %v485
    %v487 = vpop.f32.mrf.mxu0
    %488 = vdwg.mxu0
    %489 = vmatpush.bf16.msra.mxu0 %v442
    %490 = vmatpush.bf16.msra.mxu0 %v440
    %491 = vmatpush.bf16.msra.mxu0 %v438
    %492 = vmatpush.bf16.msra.mxu0 %v436
    %493 = vmatpush.bf16.msra.mxu0 %v434
    %494 = vmatpush.bf16.msra.mxu0 %v432
    %495 = vmatpush.bf16.msra.mxu0 %v430
    %496 = vmatpush.bf16.msra.mxu0 %v428
    %497 = vmatmul.bf16.gmra.mxu0 %v310
    %v498 = vpop.f32.mrf.mxu0
    %v499 = vadd.f32 %v486, %v498
    %v500 = vpop.f32.mrf.mxu0
    %501 = vdwg.mxu0
    %502 = vmatpush.bf16.msra.mxu0 %v427
    %503 = vmatpush.bf16.msra.mxu0 %v425
    %504 = vmatpush.bf16.msra.mxu0 %v423
    %505 = vmatpush.bf16.msra.mxu0 %v421
    %506 = vmatpush.bf16.msra.mxu0 %v419
    %507 = vmatpush.bf16.msra.mxu0 %v417
    %508 = vmatpush.bf16.msra.mxu0 %v415
    %509 = vmatpush.bf16.msra.mxu0 %v413
    %510 = vmatmul.bf16.gmra.mxu0 %v309
    %v511 = vpop.f32.mrf.mxu0
    %v512 = vadd.f32 %v313, %v511
    %v513 = vpop.f32.mrf.mxu0
    %514 = vdwg.mxu0
    %515 = vmatpush.bf16.msra.mxu0 %v443
    %516 = vmatpush.bf16.msra.mxu0 %v441
    %517 = vmatpush.bf16.msra.mxu0 %v439
    %518 = vmatpush.bf16.msra.mxu0 %v437
    %519 = vmatpush.bf16.msra.mxu0 %v435
    %520 = vmatpush.bf16.msra.mxu0 %v433
    %521 = vmatpush.bf16.msra.mxu0 %v431
    %522 = vmatpush.bf16.msra.mxu0 %v429
    %523 = vmatmul.bf16.gmra.mxu0 %v310
    %v524 = vpop.f32.mrf.mxu0
    %v525 = vadd.f32 %v512, %v524
    %v526 = vpop.f32.mrf.mxu0
    %527 = vdwg.mxu0
    %v528 = vmax.f32 %v499, 0.0
    %v529 = vmax.f32 %v525, 0.0
    %v530 = vpack.c.bf16 %v528, %v528
    %v531 = vpack.c.bf16 %v529, %v529
    %v564 = vunpack.c.l.b16 %v251
    %v565 = vunpack.c.l.b16 %v252
    %v566 = vunpack.c.l.b16 %v253
    %v567 = vunpack.c.l.b16 %v254
    %v568 = vunpack.c.l.b16 %v255
    %v569 = vunpack.c.l.b16 %v256
    %v570 = vunpack.c.l.b16 %v257
    %v571 = vunpack.c.l.b16 %v258
    %v572 = vunpack.c.l.b16 %v259
    %v573 = vunpack.c.l.b16 %v260
    %v574 = vunpack.c.l.b16 %v261
    %v575 = vunpack.c.l.b16 %v262
    %v576 = vunpack.c.l.b16 %v263
    %v577 = vunpack.c.l.b16 %v264
    %v578 = vunpack.c.l.b16 %v265
    %v579 = vunpack.c.l.b16 %v266
    %v580 = vunpack.c.l.b16 %v267
    %v581 = vunpack.c.l.b16 %v268
    %v582 = vunpack.c.l.b16 %v269
    %v583 = vunpack.c.l.b16 %v270
    %v584 = vunpack.c.l.b16 %v271
    %v585 = vunpack.c.l.b16 %v272
    %v586 = vunpack.c.l.b16 %v273
    %v587 = vunpack.c.l.b16 %v274
    %v588 = vunpack.c.l.b16 %v275
    %v589 = vunpack.c.l.b16 %v276
    %v590 = vunpack.c.l.b16 %v277
    %v591 = vunpack.c.l.b16 %v278
    %v592 = vunpack.c.l.b16 %v279
    %v593 = vunpack.c.l.b16 %v280
    %v594 = vunpack.c.l.b16 %v281
    %v595 = vunpack.c.l.b16 %v282
    %v596 = vpack.c.b16 %v565, %v564
    %v597 = vpack.c.b16 %v567, %v566
    %v598 = vpack.c.b16 %v569, %v568
    %v599 = vpack.c.b16 %v571, %v570
    %v600 = vpack.c.b16 %v573, %v572
    %v601 = vpack.c.b16 %v575, %v574
    %v602 = vpack.c.b16 %v577, %v576
    %v603 = vpack.c.b16 %v579, %v578
    %v604 = vpack.c.b16 %v581, %v580
    %v605 = vpack.c.b16 %v583, %v582
    %v606 = vpack.c.b16 %v585, %v584
    %v607 = vpack.c.b16 %v587, %v586
    %v608 = vpack.c.b16 %v589, %v588
    %v609 = vpack.c.b16 %v591, %v590
    %v610 = vpack.c.b16 %v593, %v592
    %v611 = vpack.c.b16 %v595, %v594
    %628 = vmatpush.bf16.msra.mxu0 %v603
    %629 = vmatpush.bf16.msra.mxu0 %v602
    %630 = vmatpush.bf16.msra.mxu0 %v601
    %631 = vmatpush.bf16.msra.mxu0 %v600
    %632 = vmatpush.bf16.msra.mxu0 %v599
    %633 = vmatpush.bf16.msra.mxu0 %v598
    %634 = vmatpush.bf16.msra.mxu0 %v597
    %635 = vmatpush.bf16.msra.mxu0 %v596
    %636 = vmatmul.bf16.gmra.mxu0 %v309
    %v637 = vpop.f32.mrf.mxu0
    %v638 = vadd.f32 0.0, %v637
    %v639 = vpop.f32.mrf.mxu0
    %640 = vdwg.mxu0
    %641 = vmatpush.bf16.msra.mxu0 %v611
    %642 = vmatpush.bf16.msra.mxu0 %v610
    %643 = vmatpush.bf16.msra.mxu0 %v609
    %644 = vmatpush.bf16.msra.mxu0 %v608
    %645 = vmatpush.bf16.msra.mxu0 %v607
    %646 = vmatpush.bf16.msra.mxu0 %v606
    %647 = vmatpush.bf16.msra.mxu0 %v605
    %648 = vmatpush.bf16.msra.mxu0 %v604
    %649 = vmatmul.bf16.gmra.mxu0 %v310
    %v650 = vpop.f32.mrf.mxu0
    %v651 = vadd.f32 %v638, %v650
    %v652 = vpop.f32.mrf.mxu0
    %653 = vdwg.mxu0
    %v686 = vunpack.c.l.b16 %v219
    %v687 = vunpack.c.l.b16 %v220
    %v688 = vunpack.c.l.b16 %v221
    %v689 = vunpack.c.l.b16 %v222
    %v690 = vunpack.c.l.b16 %v223
    %v691 = vunpack.c.l.b16 %v224
    %v692 = vunpack.c.l.b16 %v225
    %v693 = vunpack.c.l.b16 %v226
    %v694 = vunpack.c.l.b16 %v227
    %v695 = vunpack.c.l.b16 %v228
    %v696 = vunpack.c.l.b16 %v229
    %v697 = vunpack.c.l.b16 %v230
    %v698 = vunpack.c.l.b16 %v231
    %v699 = vunpack.c.l.b16 %v232
    %v700 = vunpack.c.l.b16 %v233
    %v701 = vunpack.c.l.b16 %v234
    %v702 = vunpack.c.l.b16 %v235
    %v703 = vunpack.c.l.b16 %v236
    %v704 = vunpack.c.l.b16 %v237
    %v705 = vunpack.c.l.b16 %v238
    %v706 = vunpack.c.l.b16 %v239
    %v707 = vunpack.c.l.b16 %v240
    %v708 = vunpack.c.l.b16 %v241
    %v709 = vunpack.c.l.b16 %v242
    %v710 = vunpack.c.l.b16 %v243
    %v711 = vunpack.c.l.b16 %v244
    %v712 = vunpack.c.l.b16 %v245
    %v713 = vunpack.c.l.b16 %v246
    %v714 = vunpack.c.l.b16 %v247
    %v715 = vunpack.c.l.b16 %v248
    %v716 = vunpack.c.l.b16 %v249
    %v717 = vunpack.c.l.b16 %v250
    %v718 = vpack.c.b16 %v687, %v686
    %v719 = vpack.c.b16 %v689, %v688
    %v720 = vpack.c.b16 %v691, %v690
    %v721 = vpack.c.b16 %v693, %v692
    %v722 = vpack.c.b16 %v695, %v694
    %v723 = vpack.c.b16 %v697, %v696
    %v724 = vpack.c.b16 %v699, %v698
    %v725 = vpack.c.b16 %v701, %v700
    %v726 = vpack.c.b16 %v703, %v702
    %v727 = vpack.c.b16 %v705, %v704
    %v728 = vpack.c.b16 %v707, %v706
    %v729 = vpack.c.b16 %v709, %v708
    %v730 = vpack.c.b16 %v711, %v710
    %v731 = vpack.c.b16 %v713, %v712
    %v732 = vpack.c.b16 %v715, %v714
    %v733 = vpack.c.b16 %v717, %v716
    %750 = vmatpush.bf16.msra.mxu0 %v725
    %751 = vmatpush.bf16.msra.mxu0 %v724
    %752 = vmatpush.bf16.msra.mxu0 %v723
    %753 = vmatpush.bf16.msra.mxu0 %v722
    %754 = vmatpush.bf16.msra.mxu0 %v721
    %755 = vmatpush.bf16.msra.mxu0 %v720
    %756 = vmatpush.bf16.msra.mxu0 %v719
    %757 = vmatpush.bf16.msra.mxu0 %v718
    %758 = vmatmul.bf16.gmra.mxu0 %v530
    %v759 = vpop.f32.mrf.mxu0
    %v760 = vadd.f32 %v651, %v759
    %v761 = vpop.f32.mrf.mxu0
    %762 = vdwg.mxu0
    %763 = vmatpush.bf16.msra.mxu0 %v733
    %764 = vmatpush.bf16.msra.mxu0 %v732
    %765 = vmatpush.bf16.msra.mxu0 %v731
    %766 = vmatpush.bf16.msra.mxu0 %v730
    %767 = vmatpush.bf16.msra.mxu0 %v729
    %768 = vmatpush.bf16.msra.mxu0 %v728
    %769 = vmatpush.bf16.msra.mxu0 %v727
    %770 = vmatpush.bf16.msra.mxu0 %v726
    %771 = vmatmul.bf16.gmra.mxu0 %v531
    %v772 = vpop.f32.mrf.mxu0
    %v773 = vadd.f32 %v760, %v772
    %v774 = vpop.f32.mrf.mxu0
    %775 = vdwg.mxu0
    %v776 = vperm.slane %v300, 0
    %v777 = vadd.f32 %v773, %v776
    %778 = vmatpush.msra.mxu0 %v298
    %779 = vmatpush.msra.mxu0 %v297
    %780 = vmatpush.msra.mxu0 %v296
    %781 = vmatpush.msra.mxu0 %v295
    %782 = vmatpush.msra.mxu0 %v294
    %783 = vmatpush.msra.mxu0 %v293
    %784 = vmatpush.msra.mxu0 %v292
    %785 = vmatpush.msra.mxu0 %v291
    %786 = vmatpush.msra.mxu0 %v290
    %787 = vmatpush.msra.mxu0 %v289
    %788 = vmatpush.msra.mxu0 %v288
    %789 = vmatpush.msra.mxu0 %v287
    %790 = vmatpush.msra.mxu0 %v286
    %791 = vmatpush.msra.mxu0 %v285
    %792 = vmatpush.msra.mxu0 %v284
    %793 = vmatpush.msra.mxu0 %v283
    %794 = vmatmul.f32.gmra.mxu0 %v777
    %v795 = vpop.f32.mrf.mxu0
    %v796 = vadd.f32 0.0, %v795
    %797 = vdwg.mxu0
    %v798 = vsub.f32 %v777, %v796
    %v799 = vmul.f32 %v798, %v798
    %800 = vmatpush.msra.mxu0 %v298
    %801 = vmatpush.msra.mxu0 %v297
    %802 = vmatpush.msra.mxu0 %v296
    %803 = vmatpush.msra.mxu0 %v295
    %804 = vmatpush.msra.mxu0 %v294
    %805 = vmatpush.msra.mxu0 %v293
    %806 = vmatpush.msra.mxu0 %v292
    %807 = vmatpush.msra.mxu0 %v291
    %808 = vmatpush.msra.mxu0 %v290
    %809 = vmatpush.msra.mxu0 %v289
    %810 = vmatpush.msra.mxu0 %v288
    %811 = vmatpush.msra.mxu0 %v287
    %812 = vmatpush.msra.mxu0 %v286
    %813 = vmatpush.msra.mxu0 %v285
    %814 = vmatpush.msra.mxu0 %v284
    %815 = vmatpush.msra.mxu0 %v283
    %816 = vmatmul.f32.gmra.mxu0 %v799
    %v817 = vpop.f32.mrf.mxu0
    %v818 = vadd.f32 1e-05, %v817
    %819 = vdwg.mxu0
    %v820 = vrsqrt.pop %v818
    %v821 = vmul.f32 %v820, %v818
    %v822 = vmul.f32 %v821, %v820
    %v823 = vmul.f32 0.5, %v822
    %v824 = vsub.f32 1.5, %v823
    %v825 = vmul.f32 %v820, %v824
    %vm826 = vweird.f32 %v818
    %vm827 = vweird.f32 %v820
    %vm828 = vmor %vm826, %vm827
    %v829 = vsel %vm828, %v820, %v825
    %v830 = vperm.slane %v301, 0
    %v831 = vmul.f32 %v829, %v830
    %v832 = vmul.f32 %v798, %v831
    %v833 = vperm.slane %v302, 0
    %v834 = vadd.f32 %v832, %v833
    %v835 = vld [vmem:[#allocation13] sm:$0xff]
    %v836 = vld [vmem:[#allocation13 + $0x8] sm:$0xff]
    %v837 = vld [vmem:[#allocation13 + $0x10] sm:$0xff]
    %v838 = vld [vmem:[#allocation13 + $0x18] sm:$0xff]
    %v839 = vld [vmem:[#allocation13 + $0x20] sm:$0xff]
    %v840 = vld [vmem:[#allocation13 + $0x28] sm:$0xff]
    %v841 = vld [vmem:[#allocation13 + $0x30] sm:$0xff]
    %v842 = vld [vmem:[#allocation13 + $0x38] sm:$0xff]
    %v843 = vld [vmem:[#allocation13 + $0x40] sm:$0xff]
    %v844 = vld [vmem:[#allocation13 + $0x48] sm:$0xff]
    %v845 = vld [vmem:[#allocation13 + $0x50] sm:$0xff]
    %v846 = vld [vmem:[#allocation13 + $0x58] sm:$0xff]
    %v847 = vld [vmem:[#allocation13 + $0x60] sm:$0xff]
    %v848 = vld [vmem:[#allocation13 + $0x68] sm:$0xff]
    %v849 = vld [vmem:[#allocation13 + $0x70] sm:$0xff]
    %v850 = vld [vmem:[#allocation13 + $0x78] sm:$0xff]
    %v851 = vld [vmem:[#allocation14] sm:$0xf]
    %v852 = vld [vmem:[#allocation14 + $0x4] sm:$0xf]
    %v853 = vld [vmem:[#allocation14 + $0x8] sm:$0xf]
    %v854 = vld [vmem:[#allocation14 + $0xc] sm:$0xf]
    %v855 = vld [vmem:[#allocation14 + $0x10] sm:$0xf]
    %v856 = vld [vmem:[#allocation14 + $0x14] sm:$0xf]
    %v857 = vld [vmem:[#allocation14 + $0x18] sm:$0xf]
    %v858 = vld [vmem:[#allocation14 + $0x1c] sm:$0xf]
    %v859 = vld [vmem:[#allocation14 + $0x20] sm:$0xf]
    %v860 = vld [vmem:[#allocation14 + $0x24] sm:$0xf]
    %v861 = vld [vmem:[#allocation14 + $0x28] sm:$0xf]
    %v862 = vld [vmem:[#allocation14 + $0x2c] sm:$0xf]
    %v863 = vld [vmem:[#allocation14 + $0x30] sm:$0xf]
    %v864 = vld [vmem:[#allocation14 + $0x34] sm:$0xf]
    %v865 = vld [vmem:[#allocation14 + $0x38] sm:$0xf]
    %v866 = vld [vmem:[#allocation14 + $0x3c] sm:$0xf]
    %v867 = vld [vmem:[#allocation14 + $0x40] sm:$0xf]
    %v868 = vld [vmem:[#allocation14 + $0x44] sm:$0xf]
    %v869 = vld [vmem:[#allocation14 + $0x48] sm:$0xf]
    %v870 = vld [vmem:[#allocation14 + $0x4c] sm:$0xf]
    %v871 = vld [vmem:[#allocation14 + $0x50] sm:$0xf]
    %v872 = vld [vmem:[#allocation14 + $0x54] sm:$0xf]
    %v873 = vld [vmem:[#allocation14 + $0x58] sm:$0xf]
    %v874 = vld [vmem:[#allocation14 + $0x5c] sm:$0xf]
    %v875 = vld [vmem:[#allocation14 + $0x60] sm:$0xf]
    %v876 = vld [vmem:[#allocation14 + $0x64] sm:$0xf]
    %v877 = vld [vmem:[#allocation14 + $0x68] sm:$0xf]
    %v878 = vld [vmem:[#allocation14 + $0x6c] sm:$0xf]
    %v879 = vld [vmem:[#allocation14 + $0x70] sm:$0xf]
    %v880 = vld [vmem:[#allocation14 + $0x74] sm:$0xf]
    %v881 = vld [vmem:[#allocation14 + $0x78] sm:$0xf]
    %v882 = vld [vmem:[#allocation14 + $0x7c] sm:$0xf]
    %v883 = vld [vmem:[#allocation17] sm:$0xff]
    %v884 = vld [vmem:[#allocation17 + $0x8] sm:$0xff]
    %v885 = vld [vmem:[#allocation17 + $0x10] sm:$0xff]
    %v886 = vld [vmem:[#allocation17 + $0x18] sm:$0xff]
    %v887 = vld [vmem:[#allocation17 + $0x20] sm:$0xff]
    %v888 = vld [vmem:[#allocation17 + $0x28] sm:$0xff]
    %v889 = vld [vmem:[#allocation17 + $0x30] sm:$0xff]
    %v890 = vld [vmem:[#allocation17 + $0x38] sm:$0xff]
    %v891 = vld [vmem:[#allocation17 + $0x40] sm:$0xff]
    %v892 = vld [vmem:[#allocation17 + $0x48] sm:$0xff]
    %v893 = vld [vmem:[#allocation17 + $0x50] sm:$0xff]
    %v894 = vld [vmem:[#allocation17 + $0x58] sm:$0xff]
    %v895 = vld [vmem:[#allocation17 + $0x60] sm:$0xff]
    %v896 = vld [vmem:[#allocation17 + $0x68] sm:$0xff]
    %v897 = vld [vmem:[#allocation17 + $0x70] sm:$0xff]
    %v898 = vld [vmem:[#allocation17 + $0x78] sm:$0xff]
    %v899 = vld [vmem:[#allocation16] ss:$4 sm:$0x3]
    %v900 = vld [vmem:[#allocation16 + $0x1] sm:$0x1]
    %v901 = vld [vmem:[#allocation16 + $0x2] sm:$0x1]
    %v902 = vld [vmem:[#allocation16 + $0x3] sm:$0x1]
    %v903 = vpack.c.bf16 %v834, %v834
    %v905 = vperm.slane %v899, 0
    %v906 = vperm.slane %v899, 1
    %v925 = vunpack.c.l.b16 %v835
    %v926 = vunpack.c.h.b16 %v835
    %v927 = vunpack.c.l.b16 %v836
    %v928 = vunpack.c.h.b16 %v836
    %v929 = vunpack.c.l.b16 %v837
    %v930 = vunpack.c.h.b16 %v837
    %v931 = vunpack.c.l.b16 %v838
    %v932 = vunpack.c.h.b16 %v838
    %v933 = vunpack.c.l.b16 %v839
    %v934 = vunpack.c.h.b16 %v839
    %v935 = vunpack.c.l.b16 %v840
    %v936 = vunpack.c.h.b16 %v840
    %v937 = vunpack.c.l.b16 %v841
    %v938 = vunpack.c.h.b16 %v841
    %v939 = vunpack.c.l.b16 %v842
    %v940 = vunpack.c.h.b16 %v842
    %v941 = vunpack.c.l.b16 %v843
    %v942 = vunpack.c.h.b16 %v843
    %v943 = vunpack.c.l.b16 %v844
    %v944 = vunpack.c.h.b16 %v844
    %v945 = vunpack.c.l.b16 %v845
    %v946 = vunpack.c.h.b16 %v845
    %v947 = vunpack.c.l.b16 %v846
    %v948 = vunpack.c.h.b16 %v846
    %v949 = vunpack.c.l.b16 %v847
    %v950 = vunpack.c.h.b16 %v847
    %v951 = vunpack.c.l.b16 %v848
    %v952 = vunpack.c.h.b16 %v848
    %v953 = vunpack.c.l.b16 %v849
    %v954 = vunpack.c.h.b16 %v849
    %v955 = vunpack.c.l.b16 %v850
    %v956 = vunpack.c.h.b16 %v850
    %v957 = vpack.c.b16 %v927, %v925
    %v958 = vpack.c.b16 %v928, %v926
    %v959 = vpack.c.b16 %v931, %v929
    %v960 = vpack.c.b16 %v932, %v930
    %v961 = vpack.c.b16 %v935, %v933
    %v962 = vpack.c.b16 %v936, %v934
    %v963 = vpack.c.b16 %v939, %v937
    %v964 = vpack.c.b16 %v940, %v938
    %v965 = vpack.c.b16 %v943, %v941
    %v966 = vpack.c.b16 %v944, %v942
    %v967 = vpack.c.b16 %v947, %v945
    %v968 = vpack.c.b16 %v948, %v946
    %v969 = vpack.c.b16 %v951, %v949
    %v970 = vpack.c.b16 %v952, %v950
    %v971 = vpack.c.b16 %v955, %v953
    %v972 = vpack.c.b16 %v956, %v954
    %989 = vmatpush.bf16.msra.mxu0 %v971
    %990 = vmatpush.bf16.msra.mxu0 %v969
    %991 = vmatpush.bf16.msra.mxu0 %v967
    %992 = vmatpush.bf16.msra.mxu0 %v965
    %993 = vmatpush.bf16.msra.mxu0 %v963
    %994 = vmatpush.bf16.msra.mxu0 %v961
    %995 = vmatpush.bf16.msra.mxu0 %v959
    %996 = vmatpush.bf16.msra.mxu0 %v957
    %997 = vmatmul.bf16.gmra.mxu0 %v903
    %v998 = vpop.f32.mrf.mxu0
    %v999 = vadd.f32 %v905, %v998
    %v1000 = vpop.f32.mrf.mxu0
    %1001 = vdwg.mxu0
    %1002 = vmatpush.bf16.msra.mxu0 %v972
    %1003 = vmatpush.bf16.msra.mxu0 %v970
    %1004 = vmatpush.bf16.msra.mxu0 %v968
    %1005 = vmatpush.bf16.msra.mxu0 %v966
    %1006 = vmatpush.bf16.msra.mxu0 %v964
    %1007 = vmatpush.bf16.msra.mxu0 %v962
    %1008 = vmatpush.bf16.msra.mxu0 %v960
    %1009 = vmatpush.bf16.msra.mxu0 %v958
    %1010 = vmatmul.bf16.gmra.mxu0 %v903
    %v1011 = vpop.f32.mrf.mxu0
    %v1012 = vadd.f32 %v906, %v1011
    %v1013 = vpop.f32.mrf.mxu0
    %1014 = vdwg.mxu0
    %v1015 = vmax.f32 %v999, 0.0
    %v1016 = vmax.f32 %v1012, 0.0
    %v1017 = vpack.c.bf16 %v1015, %v1015
    %v1018 = vpack.c.bf16 %v1016, %v1016
    %v1051 = vunpack.c.l.b16 %v851
    %v1052 = vunpack.c.l.b16 %v852
    %v1053 = vunpack.c.l.b16 %v853
    %v1054 = vunpack.c.l.b16 %v854
    %v1055 = vunpack.c.l.b16 %v855
    %v1056 = vunpack.c.l.b16 %v856
    %v1057 = vunpack.c.l.b16 %v857
    %v1058 = vunpack.c.l.b16 %v858
    %v1059 = vunpack.c.l.b16 %v859
    %v1060 = vunpack.c.l.b16 %v860
    %v1061 = vunpack.c.l.b16 %v861
    %v1062 = vunpack.c.l.b16 %v862
    %v1063 = vunpack.c.l.b16 %v863
    %v1064 = vunpack.c.l.b16 %v864
    %v1065 = vunpack.c.l.b16 %v865
    %v1066 = vunpack.c.l.b16 %v866
    %v1067 = vunpack.c.l.b16 %v867
    %v1068 = vunpack.c.l.b16 %v868
    %v1069 = vunpack.c.l.b16 %v869
    %v1070 = vunpack.c.l.b16 %v870
    %v1071 = vunpack.c.l.b16 %v871
    %v1072 = vunpack.c.l.b16 %v872
    %v1073 = vunpack.c.l.b16 %v873
    %v1074 = vunpack.c.l.b16 %v874
    %v1075 = vunpack.c.l.b16 %v875
    %v1076 = vunpack.c.l.b16 %v876
    %v1077 = vunpack.c.l.b16 %v877
    %v1078 = vunpack.c.l.b16 %v878
    %v1079 = vunpack.c.l.b16 %v879
    %v1080 = vunpack.c.l.b16 %v880
    %v1081 = vunpack.c.l.b16 %v881
    %v1082 = vunpack.c.l.b16 %v882
    %v1083 = vpack.c.b16 %v1052, %v1051
    %v1084 = vpack.c.b16 %v1054, %v1053
    %v1085 = vpack.c.b16 %v1056, %v1055
    %v1086 = vpack.c.b16 %v1058, %v1057
    %v1087 = vpack.c.b16 %v1060, %v1059
    %v1088 = vpack.c.b16 %v1062, %v1061
    %v1089 = vpack.c.b16 %v1064, %v1063
    %v1090 = vpack.c.b16 %v1066, %v1065
    %v1091 = vpack.c.b16 %v1068, %v1067
    %v1092 = vpack.c.b16 %v1070, %v1069
    %v1093 = vpack.c.b16 %v1072, %v1071
    %v1094 = vpack.c.b16 %v1074, %v1073
    %v1095 = vpack.c.b16 %v1076, %v1075
    %v1096 = vpack.c.b16 %v1078, %v1077
    %v1097 = vpack.c.b16 %v1080, %v1079
    %v1098 = vpack.c.b16 %v1082, %v1081
    %1115 = vmatpush.bf16.msra.mxu0 %v1090
    %1116 = vmatpush.bf16.msra.mxu0 %v1089
    %1117 = vmatpush.bf16.msra.mxu0 %v1088
    %1118 = vmatpush.bf16.msra.mxu0 %v1087
    %1119 = vmatpush.bf16.msra.mxu0 %v1086
    %1120 = vmatpush.bf16.msra.mxu0 %v1085
    %1121 = vmatpush.bf16.msra.mxu0 %v1084
    %1122 = vmatpush.bf16.msra.mxu0 %v1083
    %1123 = vmatmul.bf16.gmra.mxu0 %v1017
    %v1124 = vpop.f32.mrf.mxu0
    %v1125 = vadd.f32 %v834, %v1124
    %v1126 = vpop.f32.mrf.mxu0
    %1127 = vdwg.mxu0
    %1128 = vmatpush.bf16.msra.mxu0 %v1098
    %1129 = vmatpush.bf16.msra.mxu0 %v1097
    %1130 = vmatpush.bf16.msra.mxu0 %v1096
    %1131 = vmatpush.bf16.msra.mxu0 %v1095
    %1132 = vmatpush.bf16.msra.mxu0 %v1094
    %1133 = vmatpush.bf16.msra.mxu0 %v1093
    %1134 = vmatpush.bf16.msra.mxu0 %v1092
    %1135 = vmatpush.bf16.msra.mxu0 %v1091
    %1136 = vmatmul.bf16.gmra.mxu0 %v1018
    %v1137 = vpop.f32.mrf.mxu0
    %v1138 = vadd.f32 %v1125, %v1137
    %v1139 = vpop.f32.mrf.mxu0
    %1140 = vdwg.mxu0
    %v1141 = vperm.slane %v900, 0
    %v1142 = vadd.f32 %v1138, %v1141
    %1143 = vmatpush.msra.mxu0 %v898
    %1144 = vmatpush.msra.mxu0 %v897
    %1145 = vmatpush.msra.mxu0 %v896
    %1146 = vmatpush.msra.mxu0 %v895
    %1147 = vmatpush.msra.mxu0 %v894
    %1148 = vmatpush.msra.mxu0 %v893
    %1149 = vmatpush.msra.mxu0 %v892
    %1150 = vmatpush.msra.mxu0 %v891
    %1151 = vmatpush.msra.mxu0 %v890
    %1152 = vmatpush.msra.mxu0 %v889
    %1153 = vmatpush.msra.mxu0 %v888
    %1154 = vmatpush.msra.mxu0 %v887
    %1155 = vmatpush.msra.mxu0 %v886
    %1156 = vmatpush.msra.mxu0 %v885
    %1157 = vmatpush.msra.mxu0 %v884
    %1158 = vmatpush.msra.mxu0 %v883
    %1159 = vmatmul.f32.gmra.mxu0 %v1142
    %v1160 = vpop.f32.mrf.mxu0
    %v1161 = vadd.f32 0.0, %v1160
    %1162 = vdwg.mxu0
    %v1163 = vsub.f32 %v1142, %v1161
    %v1164 = vmul.f32 %v1163, %v1163
    %1165 = vmatpush.msra.mxu0 %v898
    %1166 = vmatpush.msra.mxu0 %v897
    %1167 = vmatpush.msra.mxu0 %v896
    %1168 = vmatpush.msra.mxu0 %v895
    %1169 = vmatpush.msra.mxu0 %v894
    %1170 = vmatpush.msra.mxu0 %v893
    %1171 = vmatpush.msra.mxu0 %v892
    %1172 = vmatpush.msra.mxu0 %v891
    %1173 = vmatpush.msra.mxu0 %v890
    %1174 = vmatpush.msra.mxu0 %v889
    %1175 = vmatpush.msra.mxu0 %v888
    %1176 = vmatpush.msra.mxu0 %v887
    %1177 = vmatpush.msra.mxu0 %v886
    %1178 = vmatpush.msra.mxu0 %v885
    %1179 = vmatpush.msra.mxu0 %v884
    %1180 = vmatpush.msra.mxu0 %v883
    %1181 = vmatmul.f32.gmra.mxu0 %v1164
    %v1182 = vpop.f32.mrf.mxu0
    %v1183 = vadd.f32 1e-05, %v1182
    %1184 = vdwg.mxu0
    %v1185 = vrsqrt.pop %v1183
    %v1186 = vmul.f32 %v1185, %v1183
    %v1187 = vmul.f32 %v1186, %v1185
    %v1188 = vmul.f32 0.5, %v1187
    %v1189 = vsub.f32 1.5, %v1188
    %v1190 = vmul.f32 %v1185, %v1189
    %vm1191 = vweird.f32 %v1183
    %vm1192 = vweird.f32 %v1185
    %vm1193 = vmor %vm1191, %vm1192
    %v1194 = vsel %vm1193, %v1185, %v1190
    %v1195 = vperm.slane %v901, 0
    %v1196 = vmul.f32 %v1194, %v1195
    %v1197 = vmul.f32 %v1163, %v1196
    %v1198 = vperm.slane %v902, 0
    %v1199 = vadd.f32 %v1197, %v1198
    %1200 = vst [vmem:[#allocation19] sm:$0x3] %v1199
    // Predicated region
    $region82: #{tpu_custom_call.1} parent=1 // pred_check
      _
    $region83: #{tpu_custom_call.1} parent=1 // pred_check_branch
      %1202 = sbr.rel (0) target = $region85
    $region84: #{tpu_custom_call.1} parent=1 // pred_region
      %1204 = vsyncadd [#allocation4], 0
      %s1206 = sshll.u32 [#allocation19], 4
      %s1207 = int_to_ptr.vmem [resolvable:$true] %s1206
      %s1208 = sshll.u32 %s10, 4
      %s1209 = int_to_ptr.hbm [resolvable:$true] %s1208
      %1211 = dma.vmem_to_hbm [thread:$0]  %s1207, 32, %s1209, [#allocation4]
    $region85: #{tpu_custom_call.1} parent=1 // pred_fallthru
      _
    // Predicated region
    $region86: #{tpu_custom_call.1} parent=1 // pred_check
      _
    $region87: #{tpu_custom_call.1} parent=1 // pred_check_branch
      %1213 = sbr.rel (0) target = $region89
    $region88: #{tpu_custom_call.1} parent=1 // pred_region
      %1215 = dma.done [#allocation4], 32
    $region89: #{tpu_custom_call.1} parent=1 // pred_fallthru
      _
    %1216 = vsyncpa [#allocation3], 1
    %1217 = vsyncpa [#allocation6], 1
    %1218 = vsyncpa [#allocation9], 1
    %1219 = vsyncpa [#allocation12], 1
    %1220 = vsyncpa [#allocation15], 1
    %1221 = vsyncpa [#allocation18], 1
    %1222 = vsyncpa [#allocation4], 1

// kernel: tpu_custom_call.1
$region0: #{tpu_custom_call.1}
  #allocation0 [shape = 'u32[]', space=smem, size = 0x4, offset = 0x4, fixed_abs, tag = 'smem constant byte address 0x4 - core index']
  #allocation1 [shape = 'u32[72,128]{1,0:T(1,128)}', space=vmem, size = 0x9000, scoped, tag = 'internal scratch']
  %s0 = inlined_call_operand.hbm [shape: f32[2,256], index: 0, kind: input, shape index: {}]
  %s1 = inlined_call_operand.hbm [shape: bf16[256,256], index: 1, kind: input, shape index: {}]
  %s2 = inlined_call_operand.hbm [shape: bf16[256,128], index: 2, kind: input, shape index: {}]
  %s3 = inlined_call_operand.hbm [shape: bf16[256,128], index: 3, kind: input, shape index: {}]
  %s4 = inlined_call_operand.hbm [shape: f32[4,256], index: 4, kind: input, shape index: {}]
  %s5 = inlined_call_operand.hbm [shape: f32[128,128], index: 5, kind: input, shape index: {}]
  %s6 = inlined_call_operand.hbm [shape: bf16[128,256], index: 6, kind: input, shape index: {}]
  %s7 = inlined_call_operand.hbm [shape: bf16[256,128], index: 7, kind: input, shape index: {}]
  %s8 = inlined_call_operand.hbm [shape: f32[4,256], index: 8, kind: input, shape index: {}]
  %s9 = inlined_call_operand.hbm [shape: f32[128,128], index: 9, kind: input, shape index: {}]
  %s10 = inlined_call_operand.hbm [shape: f32[2,128], index: 10, kind: output, shape index: {}]
  %s11 = sld [smem:[#allocation0]]
  $region90: #{tpu_custom_call.1} parent=0
    _
  %s13 = ssub.s32 1, %s11
  %s14 = scalar_select 0, %s13, %s11
  $region1: #{tpu_custom_call.1} parent=0
    #allocation2 [shape = 'u8[2048]{0}', space=vmem, size = 0x800, scoped, tag = 'input window, operand 0, single buffered']
    #allocation3 [shape = 's32[1]{0}', space=sflag, size = 0x4, scoped, tag = 'scoped memory for tpu_custom_call.1']
    #allocation4 [shape = 's32[1]{0}', space=sflag, size = 0x4, scoped, tag = 'scoped memory for tpu_custom_call.1']
    #allocation5 [shape = 'u8[131072]{0}', space=vmem, size = 0x20000, scoped, tag = 'input window, operand 1, single buffered']
    #allocation6 [shape = 's32[1]{0}', space=sflag, size = 0x4, scoped, tag = 'scoped memory for tpu_custom_call.1']
    #allocation7 [shape = 'u8[65536]{0}', space=vmem, size = 0x10000, scoped, tag = 'input window, operand 2, single buffered']
    #allocation8 [shape = 'u8[65536]{0}', space=vmem, size = 0x10000, scoped, tag = 'input window, operand 3, single buffered']
    #allocation9 [shape = 's32[1]{0}', space=sflag, size = 0x4, scoped, tag = 'scoped memory for tpu_custom_call.1']
    #allocation10 [shape = 'u8[4096]{0}', space=vmem, size = 0x1000, scoped, tag = 'input window, operand 4, single buffered']
    #allocation11 [shape = 'u8[65536]{0}', space=vmem, size = 0x10000, scoped, tag = 'input window, operand 5, single buffered']
    #allocation12 [shape = 's32[1]{0}', space=sflag, size = 0x4, scoped, tag = 'scoped memory for tpu_custom_call.1']
    #allocation13 [shape = 'u8[65536]{0}', space=vmem, size = 0x10000, scoped, tag = 'input window, operand 6, single buffered']
    #allocation14 [shape = 'u8[65536]{0}', space=vmem, size = 0x10000, scoped, tag = 'input window, operand 7, single buffered']
    #allocation15 [shape = 's32[1]{0}', space=sflag, size = 0x4, scoped, tag = 'scoped memory for tpu_custom_call.1']
    #allocation16 [shape = 'u8[4096]{0}', space=vmem, size = 0x1000, scoped, tag = 'input window, operand 8, single buffered']
    #allocation17 [shape = 'u8[65536]{0}', space=vmem, size = 0x10000, scoped, tag = 'input window, operand 9, single buffered']
    #allocation18 [shape = 's32[1]{0}', space=sflag, size = 0x4, scoped, tag = 'scoped memory for tpu_custom_call.1']
    #allocation19 [shape = 'u8[1024]{0}', space=vmem, size = 0x400, scoped, tag = 'output window, operand 0, single buffered']
    %15 = vsyncpa [#allocation3], 0
    %16 = vsyncpa [#allocation6], 0
    %17 = vsyncpa [#allocation9], 0
    %18 = vsyncpa [#allocation12], 0
    %19 = vsyncpa [#allocation15], 0
    %20 = vsyncpa [#allocation18], 0
    %21 = vsyncpa [#allocation4], 0
    // Predicated region
    $region2: #{tpu_custom_call.1} parent=1 // pred_check
      _
    $region3: #{tpu_custom_call.1} parent=1 // pred_check_branch
      %23 = sbr.rel (0) target = $region5
    $region4: #{tpu_custom_call.1} parent=1 // pred_region
      %25 = vsyncadd [#allocation3], 0
      %s27 = sshll.u32 %s0, 4
      %s28 = int_to_ptr.hbm [resolvable:$true] %s27
      %s29 = sshll.u32 [#allocation2], 4
      %s30 = int_to_ptr.vmem [resolvable:$true] %s29
      %32 = dma.hbm_to_vmem [thread:$0]  %s28, 64, %s30, [#allocation3]
    $region5: #{tpu_custom_call.1} parent=1 // pred_fallthru
      _
    // Predicated region
    $region6: #{tpu_custom_call.1} parent=1 // pred_check
      _
    $region7: #{tpu_custom_call.1} parent=1 // pred_check_branch
      %34 = sbr.rel (0) target = $region9
    $region8: #{tpu_custom_call.1} parent=1 // pred_region
      %36 = vsyncadd [#allocation6], 0
      %s37 = sshll.u32 %s1, 4
      %s38 = int_to_ptr.hbm [resolvable:$true] %s37
      %s39 = sshll.u32 [#allocation5], 4
      %s40 = int_to_ptr.vmem [resolvable:$true] %s39
      %45 = dma.hbm_to_vmem [thread:$0]  %s38, 4096, %s40, [#allocation6], 128, 128, 8
    $region9: #{tpu_custom_call.1} parent=1 // pred_fallthru
      _
    // Predicated region
    $region10: #{tpu_custom_call.1} parent=1 // pred_check
      _
    $region11: #{tpu_custom_call.1} parent=1 // pred_check_branch
      %47 = sbr.rel (0) target = $region13
    $region12: #{tpu_custom_call.1} parent=1 // pred_region
      %49 = vsyncadd [#allocation6], 0
      %s50 = sshll.u32 %s2, 4
      %s51 = int_to_ptr.hbm [resolvable:$true] %s50
      %s52 = sshll.u32 [#allocation7], 4
      %s53 = int_to_ptr.vmem [resolvable:$true] %s52
      %58 = dma.hbm_to_vmem [thread:$0]  %s51, 2048, %s53, [#allocation6], 64, 64, 4
    $region13: #{tpu_custom_call.1} parent=1 // pred_fallthru
      _
    // Predicated region
    $region14: #{tpu_custom_call.1} parent=1 // pred_check
      _
    $region15: #{tpu_custom_call.1} parent=1 // pred_check_branch
      %60 = sbr.rel (0) target = $region17
    $region16: #{tpu_custom_call.1} parent=1 // pred_region
      %62 = vsyncadd [#allocation9], 0
      %s63 = sshll.u32 %s3, 4
      %s64 = int_to_ptr.hbm [resolvable:$true] %s63
      %s65 = sshll.u32 [#allocation8], 4
      %s66 = int_to_ptr.vmem [resolvable:$true] %s65
      %71 = dma.hbm_to_vmem [thread:$0]  %s64, 2048, %s66, [#allocation9], 64, 64, 4
    $region17: #{tpu_custom_call.1} parent=1 // pred_fallthru
      _
    // Predicated region
    $region18: #{tpu_custom_call.1} parent=1 // pred_check
      _
    $region19: #{tpu_custom_call.1} parent=1 // pred_check_branch
      %73 = sbr.rel (0) target = $region21
    $region20: #{tpu_custom_call.1} parent=1 // pred_region
      %75 = vsyncadd [#allocation9], 0
      %s77 = sshll.u32 %s4, 4
      %s78 = int_to_ptr.hbm [resolvable:$true] %s77
      %s79 = sshll.u32 [#allocation10], 4
      %s80 = int_to_ptr.vmem [resolvable:$true] %s79
      %82 = dma.hbm_to_vmem [thread:$0]  %s78, 128, %s80, [#allocation9]
    $region21: #{tpu_custom_call.1} parent=1 // pred_fallthru
      _
    // Predicated region
    $region22: #{tpu_custom_call.1} parent=1 // pred_check
      _
    $region23: #{tpu_custom_call.1} parent=1 // pred_check_branch
      %84 = sbr.rel (0) target = $region25
    $region24: #{tpu_custom_call.1} parent=1 // pred_region
      %86 = vsyncadd [#allocation12], 0
      %s87 = sshll.u32 %s5, 4
      %s88 = int_to_ptr.hbm [resolvable:$true] %s87
      %s89 = sshll.u32 [#allocation11], 4
      %s90 = int_to_ptr.vmem [resolvable:$true] %s89
      %95 = dma.hbm_to_vmem [thread:$0]  %s88, 2048, %s90, [#allocation12], 128, 128, 8
    $region25: #{tpu_custom_call.1} parent=1 // pred_fallthru
      _
    // Predicated region
    $region26: #{tpu_custom_call.1} parent=1 // pred_check
      _
    $region27: #{tpu_custom_call.1} parent=1 // pred_check_branch
      %97 = sbr.rel (0) target = $region29
    $region28: #{tpu_custom_call.1} parent=1 // pred_region
      %99 = vsyncadd [#allocation12], 0
      %s100 = sshll.u32 %s6, 4
      %s101 = int_to_ptr.hbm [resolvable:$true] %s100
      %s102 = sshll.u32 [#allocation13], 4
      %s103 = int_to_ptr.vmem [resolvable:$true] %s102
      %108 = dma.hbm_to_vmem [thread:$0]  %s101, 2048, %s103, [#allocation12], 128, 128, 8
    $region29: #{tpu_custom_call.1} parent=1 // pred_fallthru
      _
    // Predicated region
    $region30: #{tpu_custom_call.1} parent=1 // pred_check
      _
    $region31: #{tpu_custom_call.1} parent=1 // pred_check_branch
      %110 = sbr.rel (0) target = $region33
    $region32: #{tpu_custom_call.1} parent=1 // pred_region
      %112 = vsyncadd [#allocation15], 0
      %s113 = sshll.u32 %s7, 4
      %s114 = int_to_ptr.hbm [resolvable:$true] %s113
      %s115 = sshll.u32 [#allocation14], 4
      %s116 = int_to_ptr.vmem [resolvable:$true] %s115
      %121 = dma.hbm_to_vmem [thread:$0]  %s114, 2048, %s116, [#allocation15], 64, 64, 4
    $region33: #{tpu_custom_call.1} parent=1 // pred_fallthru
      _
    // Predicated region
    $region34: #{tpu_custom_call.1} parent=1 // pred_check
      _
    $region35: #{tpu_custom_call.1} parent=1 // pred_check_branch
      %123 = sbr.rel (0) target = $region37
    $region36: #{tpu_custom_call.1} parent=1 // pred_region
      %125 = vsyncadd [#allocation15], 0
      %s127 = sshll.u32 %s8, 4
      %s128 = int_to_ptr.hbm [resolvable:$true] %s127
      %s129 = sshll.u32 [#allocation16], 4
      %s130 = int_to_ptr.vmem [resolvable:$true] %s129
      %132 = dma.hbm_to_vmem [thread:$0]  %s128, 128, %s130, [#allocation15]
    $region37: #{tpu_custom_call.1} parent=1 // pred_fallthru
      _
    // Predicated region
    $region38: #{tpu_custom_call.1} parent=1 // pred_check
      _
    $region39: #{tpu_custom_call.1} parent=1 // pred_check_branch
      %134 = sbr.rel (0) target = $region41
    $region40: #{tpu_custom_call.1} parent=1 // pred_region
      %136 = vsyncadd [#allocation18], 0
      %s137 = sshll.u32 %s9, 4
      %s138 = int_to_ptr.hbm [resolvable:$true] %s137
      %s139 = sshll.u32 [#allocation17], 4
      %s140 = int_to_ptr.vmem [resolvable:$true] %s139
      %145 = dma.hbm_to_vmem [thread:$0]  %s138, 2048, %s140, [#allocation18], 128, 128, 8
    $region41: #{tpu_custom_call.1} parent=1 // pred_fallthru
      _
    // Predicated region
    $region42: #{tpu_custom_call.1} parent=1 // pred_check
      _
    $region43: #{tpu_custom_call.1} parent=1 // pred_check_branch
      %147 = sbr.rel (0) target = $region45
    $region44: #{tpu_custom_call.1} parent=1 // pred_region
      %149 = dma.done [#allocation3], 64
    $region45: #{tpu_custom_call.1} parent=1 // pred_fallthru
      _
    // Predicated region
    $region46: #{tpu_custom_call.1} parent=1 // pred_check
      _
    $region47: #{tpu_custom_call.1} parent=1 // pred_check_branch
      %151 = sbr.rel (0) target = $region49
    $region48: #{tpu_custom_call.1} parent=1 // pred_region
      %153 = dma.done [#allocation6], 4096
    $region49: #{tpu_custom_call.1} parent=1 // pred_fallthru
      _
    // Predicated region
    $region50: #{tpu_custom_call.1} parent=1 // pred_check
      _
    $region51: #{tpu_custom_call.1} parent=1 // pred_check_branch
      %155 = sbr.rel (0) target = $region53
    $region52: #{tpu_custom_call.1} parent=1 // pred_region
      %157 = dma.done [#allocation6], 2048
    $region53: #{tpu_custom_call.1} parent=1 // pred_fallthru
      _
    // Predicated region
    $region54: #{tpu_custom_call.1} parent=1 // pred_check
      _
    $region55: #{tpu_custom_call.1} parent=1 // pred_check_branch
      %159 = sbr.rel (0) target = $region57
    $region56: #{tpu_custom_call.1} parent=1 // pred_region
      %161 = dma.done [#allocation9], 2048
    $region57: #{tpu_custom_call.1} parent=1 // pred_fallthru
      _
    // Predicated region
    $region58: #{tpu_custom_call.1} parent=1 // pred_check
      _
    $region59: #{tpu_custom_call.1} parent=1 // pred_check_branch
      %163 = sbr.rel (0) target = $region61
    $region60: #{tpu_custom_call.1} parent=1 // pred_region
      %165 = dma.done [#allocation9], 128
    $region61: #{tpu_custom_call.1} parent=1 // pred_fallthru
      _
    // Predicated region
    $region62: #{tpu_custom_call.1} parent=1 // pred_check
      _
    $region63: #{tpu_custom_call.1} parent=1 // pred_check_branch
      %167 = sbr.rel (0) target = $region65
    $region64: #{tpu_custom_call.1} parent=1 // pred_region
      %169 = dma.done [#allocation12], 2048
    $region65: #{tpu_custom_call.1} parent=1 // pred_fallthru
      _
    // Predicated region
    $region66: #{tpu_custom_call.1} parent=1 // pred_check
      _
    $region67: #{tpu_custom_call.1} parent=1 // pred_check_branch
      %171 = sbr.rel (0) target = $region69
    $region68: #{tpu_custom_call.1} parent=1 // pred_region
      %173 = dma.done [#allocation12], 2048
    $region69: #{tpu_custom_call.1} parent=1 // pred_fallthru
      _
    // Predicated region
    $region70: #{tpu_custom_call.1} parent=1 // pred_check
      _
    $region71: #{tpu_custom_call.1} parent=1 // pred_check_branch
      %175 = sbr.rel (0) target = $region73
    $region72: #{tpu_custom_call.1} parent=1 // pred_region
      %177 = dma.done [#allocation15], 2048
    $region73: #{tpu_custom_call.1} parent=1 // pred_fallthru
      _
    // Predicated region
    $region74: #{tpu_custom_call.1} parent=1 // pred_check
      _
    $region75: #{tpu_custom_call.1} parent=1 // pred_check_branch
      %179 = sbr.rel (0) target = $region77
    $region76: #{tpu_custom_call.1} parent=1 // pred_region
      %181 = dma.done [#allocation15], 128
    $region77: #{tpu_custom_call.1} parent=1 // pred_fallthru
      _
    // Predicated region
    $region78: #{tpu_custom_call.1} parent=1 // pred_check
      _
    $region79: #{tpu_custom_call.1} parent=1 // pred_check_branch
      %183 = sbr.rel (0) target = $region81
    $region80: #{tpu_custom_call.1} parent=1 // pred_region
      %185 = dma.done [#allocation18], 2048
    $region81: #{tpu_custom_call.1} parent=1 // pred_fallthru
      _
    %v186 = vld [vmem:[#allocation2] sm:$0xf]
    %v187 = vld [vmem:[#allocation5] sm:$0xff]
    %v188 = vld [vmem:[#allocation5 + $0x8] sm:$0xff]
    %v189 = vld [vmem:[#allocation5 + $0x10] sm:$0xff]
    %v190 = vld [vmem:[#allocation5 + $0x18] sm:$0xff]
    %v191 = vld [vmem:[#allocation5 + $0x20] sm:$0xff]
    %v192 = vld [vmem:[#allocation5 + $0x28] sm:$0xff]
    %v193 = vld [vmem:[#allocation5 + $0x30] sm:$0xff]
    %v194 = vld [vmem:[#allocation5 + $0x38] sm:$0xff]
    %v195 = vld [vmem:[#allocation5 + $0x40] sm:$0xff]
    %v196 = vld [vmem:[#allocation5 + $0x48] sm:$0xff]
    %v197 = vld [vmem:[#allocation5 + $0x50] sm:$0xff]
    %v198 = vld [vmem:[#allocation5 + $0x58] sm:$0xff]
    %v199 = vld [vmem:[#allocation5 + $0x60] sm:$0xff]
    %v200 = vld [vmem:[#allocation5 + $0x68] sm:$0xff]
    %v201 = vld [vmem:[#allocation5 + $0x70] sm:$0xff]
    %v202 = vld [vmem:[#allocation5 + $0x78] sm:$0xff]
    %v203 = vld [vmem:[#allocation5 + $0x80] sm:$0xff]
    %v204 = vld [vmem:[#allocation5 + $0x88] sm:$0xff]
    %v205 = vld [vmem:[#allocation5 + $0x90] sm:$0xff]
    %v206 = vld [vmem:[#allocation5 + $0x98] sm:$0xff]
    %v207 = vld [vmem:[#allocation5 + $0xa0] sm:$0xff]
    %v208 = vld [vmem:[#allocation5 + $0xa8] sm:$0xff]
    %v209 = vld [vmem:[#allocation5 + $0xb0] sm:$0xff]
    %v210 = vld [vmem:[#allocation5 + $0xb8] sm:$0xff]
    %v211 = vld [vmem:[#allocation5 + $0xc0] sm:$0xff]
    %v212 = vld [vmem:[#allocation5 + $0xc8] sm:$0xff]
    %v213 = vld [vmem:[#allocation5 + $0xd0] sm:$0xff]
    %v214 = vld [vmem:[#allocation5 + $0xd8] sm:$0xff]
    %v215 = vld [vmem:[#allocation5 + $0xe0] sm:$0xff]
    %v216 = vld [vmem:[#allocation5 + $0xe8] sm:$0xff]
    %v217 = vld [vmem:[#allocation5 + $0xf0] sm:$0xff]
    %v218 = vld [vmem:[#allocation5 + $0xf8] sm:$0xff]
    %v219 = vld [vmem:[#allocation7] sm:$0xf]
    %v220 = vld [vmem:[#allocation7 + $0x4] sm:$0xf]
    %v221 = vld [vmem:[#allocation7 + $0x8] sm:$0xf]
    %v222 = vld [vmem:[#allocation7 + $0xc] sm:$0xf]
    %v223 = vld [vmem:[#allocation7 + $0x10] sm:$0xf]
    %v224 = vld [vmem:[#allocation7 + $0x14] sm:$0xf]
    %v225 = vld [vmem:[#allocation7 + $0x18] sm:$0xf]
    %v226 = vld [vmem:[#allocation7 + $0x1c] sm:$0xf]
    %v227 = vld [vmem:[#allocation7 + $0x20] sm:$0xf]
    %v228 = vld [vmem:[#allocation7 + $0x24] sm:$0xf]
    %v229 = vld [vmem:[#allocation7 + $0x28] sm:$0xf]
    %v230 = vld [vmem:[#allocation7 + $0x2c] sm:$0xf]
    %v231 = vld [vmem:[#allocation7 + $0x30] sm:$0xf]
    %v232 = vld [vmem:[#allocation7 + $0x34] sm:$0xf]
    %v233 = vld [vmem:[#allocation7 + $0x38] sm:$0xf]
    %v234 = vld [vmem:[#allocation7 + $0x3c] sm:$0xf]
    %v235 = vld [vmem:[#allocation7 + $0x40] sm:$0xf]
    %v236 = vld [vmem:[#allocation7 + $0x44] sm:$0xf]
    %v237 = vld [vmem:[#allocation7 + $0x48] sm:$0xf]
    %v238 = vld [vmem:[#allocation7 + $0x4c] sm:$0xf]
    %v239 = vld [vmem:[#allocation7 + $0x50] sm:$0xf]
    %v240 = vld [vmem:[#allocation7 + $0x54] sm:$0xf]
    %v241 = vld [vmem:[#allocation7 + $0x58] sm:$0xf]
    %v242 = vld [vmem:[#allocation7 + $0x5c] sm:$0xf]
    %v243 = vld [vmem:[#allocation7 + $0x60] sm:$0xf]
    %v244 = vld [vmem:[#allocation7 + $0x64] sm:$0xf]
    %v245 = vld [vmem:[#allocation7 + $0x68] sm:$0xf]
    %v246 = vld [vmem:[#allocation7 + $0x6c] sm:$0xf]
    %v247 = vld [vmem:[#allocation7 + $0x70] sm:$0xf]
    %v248 = vld [vmem:[#allocation7 + $0x74] sm:$0xf]
    %v249 = vld [vmem:[#allocation7 + $0x78] sm:$0xf]
    %v250 = vld [vmem:[#allocation7 + $0x7c] sm:$0xf]
    %v251 = vld [vmem:[#allocation8] sm:$0xf]
    %v252 = vld [vmem:[#allocation8 + $0x4] sm:$0xf]
    %v253 = vld [vmem:[#allocation8 + $0x8] sm:$0xf]
    %v254 = vld [vmem:[#allocation8 + $0xc] sm:$0xf]
    %v255 = vld [vmem:[#allocation8 + $0x10] sm:$0xf]
    %v256 = vld [vmem:[#allocation8 + $0x14] sm:$0xf]
    %v257 = vld [vmem:[#allocation8 + $0x18] sm:$0xf]
    %v258 = vld [vmem:[#allocation8 + $0x1c] sm:$0xf]
    %v259 = vld [vmem:[#allocation8 + $0x20] sm:$0xf]
    %v260 = vld [vmem:[#allocation8 + $0x24] sm:$0xf]
    %v261 = vld [vmem:[#allocation8 + $0x28] sm:$0xf]
    %v262 = vld [vmem:[#allocation8 + $0x2c] sm:$0xf]
    %v263 = vld [vmem:[#allocation8 + $0x30] sm:$0xf]
    %v264 = vld [vmem:[#allocation8 + $0x34] sm:$0xf]
    %v265 = vld [vmem:[#allocation8 + $0x38] sm:$0xf]
    %v266 = vld [vmem:[#allocation8 + $0x3c] sm:$0xf]
    %v267 = vld [vmem:[#allocation8 + $0x40] sm:$0xf]
    %v268 = vld [vmem:[#allocation8 + $0x44] sm:$0xf]
    %v269 = vld [vmem:[#allocation8 + $0x48] sm:$0xf]
    %v270 = vld [vmem:[#allocation8 + $0x4c] sm:$0xf]
    %v271 = vld [vmem:[#allocation8 + $0x50] sm:$0xf]
    %v272 = vld [vmem:[#allocation8 + $0x54] sm:$0xf]
    %v273 = vld [vmem:[#allocation8 + $0x58] sm:$0xf]
    %v274 = vld [vmem:[#allocation8 + $0x5c] sm:$0xf]
    %v275 = vld [vmem:[#allocation8 + $0x60] sm:$0xf]
    %v276 = vld [vmem:[#allocation8 + $0x64] sm:$0xf]
    %v277 = vld [vmem:[#allocation8 + $0x68] sm:$0xf]
    %v278 = vld [vmem:[#allocation8 + $0x6c] sm:$0xf]
    %v279 = vld [vmem:[#allocation8 + $0x70] sm:$0xf]
    %v280 = vld [vmem:[#allocation8 + $0x74] sm:$0xf]
    %v281 = vld [vmem:[#allocation8 + $0x78] sm:$0xf]
    %v282 = vld [vmem:[#allocation8 + $0x7c] sm:$0xf]
    %v283 = vld [vmem:[#allocation11] sm:$0xff]
    %v284 = vld [vmem:[#allocation11 + $0x8] sm:$0xff]
    %v285 = vld [vmem:[#allocation11 + $0x10] sm:$0xff]
    %v286 = vld [vmem:[#allocation11 + $0x18] sm:$0xff]
    %v287 = vld [vmem:[#allocation11 + $0x20] sm:$0xff]
    %v288 = vld [vmem:[#allocation11 + $0x28] sm:$0xff]
    %v289 = vld [vmem:[#allocation11 + $0x30] sm:$0xff]
    %v290 = vld [vmem:[#allocation11 + $0x38] sm:$0xff]
    %v291 = vld [vmem:[#allocation11 + $0x40] sm:$0xff]
    %v292 = vld [vmem:[#allocation11 + $0x48] sm:$0xff]
    %v293 = vld [vmem:[#allocation11 + $0x50] sm:$0xff]
    %v294 = vld [vmem:[#allocation11 + $0x58] sm:$0xff]
    %v295 = vld [vmem:[#allocation11 + $0x60] sm:$0xff]
    %v296 = vld [vmem:[#allocation11 + $0x68] sm:$0xff]
    %v297 = vld [vmem:[#allocation11 + $0x70] sm:$0xff]
    %v298 = vld [vmem:[#allocation11 + $0x78] sm:$0xff]
    %v299 = vld [vmem:[#allocation10] ss:$4 sm:$0x3]
    %v300 = vld [vmem:[#allocation10 + $0x1] sm:$0x1]
    %v301 = vld [vmem:[#allocation10 + $0x2] sm:$0x1]
    %v302 = vld [vmem:[#allocation10 + $0x3] sm:$0x1]
    %304 = vst [vmem:[#allocation1] ss:$4 sm:$0xff] %v186
    %v305 = vld.sshfl [vmem:[#allocation1] sm:$0xff pattern:$0x73625140]
    %v306 = vld.sshfl [vmem:[#allocation1 + $0x8] sm:$0xff pattern:$0x73625140]
    %v309 = vpack.c.bf16 %v305, %v305
    %v310 = vpack.c.bf16 %v306, %v306
    %v312 = vperm.slane %v299, 0
    %v313 = vperm.slane %v299, 1
    %v348 = vunpack.c.l.b16 %v187
    %v349 = vunpack.c.h.b16 %v187
    %v350 = vunpack.c.l.b16 %v188
    %v351 = vunpack.c.h.b16 %v188
    %v352 = vunpack.c.l.b16 %v189
    %v353 = vunpack.c.h.b16 %v189
    %v354 = vunpack.c.l.b16 %v190
    %v355 = vunpack.c.h.b16 %v190
    %v356 = vunpack.c.l.b16 %v191
    %v357 = vunpack.c.h.b16 %v191
    %v358 = vunpack.c.l.b16 %v192
    %v359 = vunpack.c.h.b16 %v192
    %v360 = vunpack.c.l.b16 %v193
    %v361 = vunpack.c.h.b16 %v193
    %v362 = vunpack.c.l.b16 %v194
    %v363 = vunpack.c.h.b16 %v194
    %v364 = vunpack.c.l.b16 %v195
    %v365 = vunpack.c.h.b16 %v195
    %v366 = vunpack.c.l.b16 %v196
    %v367 = vunpack.c.h.b16 %v196
    %v368 = vunpack.c.l.b16 %v197
    %v369 = vunpack.c.h.b16 %v197
    %v370 = vunpack.c.l.b16 %v198
    %v371 = vunpack.c.h.b16 %v198
    %v372 = vunpack.c.l.b16 %v199
    %v373 = vunpack.c.h.b16 %v199
    %v374 = vunpack.c.l.b16 %v200
    %v375 = vunpack.c.h.b16 %v200
    %v376 = vunpack.c.l.b16 %v201
    %v377 = vunpack.c.h.b16 %v201
    %v378 = vunpack.c.l.b16 %v202
    %v379 = vunpack.c.h.b16 %v202
    %v380 = vunpack.c.l.b16 %v203
    %v381 = vunpack.c.h.b16 %v203
    %v382 = vunpack.c.l.b16 %v204
    %v383 = vunpack.c.h.b16 %v204
    %v384 = vunpack.c.l.b16 %v205
    %v385 = vunpack.c.h.b16 %v205
    %v386 = vunpack.c.l.b16 %v206
    %v387 = vunpack.c.h.b16 %v206
    %v388 = vunpack.c.l.b16 %v207
    %v389 = vunpack.c.h.b16 %v207
    %v390 = vunpack.c.l.b16 %v208
    %v391 = vunpack.c.h.b16 %v208
    %v392 = vunpack.c.l.b16 %v209
    %v393 = vunpack.c.h.b16 %v209
    %v394 = vunpack.c.l.b16 %v210
    %v395 = vunpack.c.h.b16 %v210
    %v396 = vunpack.c.l.b16 %v211
    %v397 = vunpack.c.h.b16 %v211
    %v398 = vunpack.c.l.b16 %v212
    %v399 = vunpack.c.h.b16 %v212
    %v400 = vunpack.c.l.b16 %v213
    %v401 = vunpack.c.h.b16 %v213
    %v402 = vunpack.c.l.b16 %v214
    %v403 = vunpack.c.h.b16 %v214
    %v404 = vunpack.c.l.b16 %v215
    %v405 = vunpack.c.h.b16 %v215
    %v406 = vunpack.c.l.b16 %v216
    %v407 = vunpack.c.h.b16 %v216
    %v408 = vunpack.c.l.b16 %v217
    %v409 = vunpack.c.h.b16 %v217
    %v410 = vunpack.c.l.b16 %v218
    %v411 = vunpack.c.h.b16 %v218
    %v412 = vpack.c.b16 %v350, %v348
    %v413 = vpack.c.b16 %v351, %v349
    %v414 = vpack.c.b16 %v354, %v352
    %v415 = vpack.c.b16 %v355, %v353
    %v416 = vpack.c.b16 %v358, %v356
    %v417 = vpack.c.b16 %v359, %v357
    %v418 = vpack.c.b16 %v362, %v360
    %v419 = vpack.c.b16 %v363, %v361
    %v420 = vpack.c.b16 %v366, %v364
    %v421 = vpack.c.b16 %v367, %v365
    %v422 = vpack.c.b16 %v370, %v368
    %v423 = vpack.c.b16 %v371, %v369
    %v424 = vpack.c.b16 %v374, %v372
    %v425 = vpack.c.b16 %v375, %v373
    %v426 = vpack.c.b16 %v378, %v376
    %v427 = vpack.c.b16 %v379, %v377
    %v428 = vpack.c.b16 %v382, %v380
    %v429 = vpack.c.b16 %v383, %v381
    %v430 = vpack.c.b16 %v386, %v384
    %v431 = vpack.c.b16 %v387, %v385
    %v432 = vpack.c.b16 %v390, %v388
    %v433 = vpack.c.b16 %v391, %v389
    %v434 = vpack.c.b16 %v394, %v392
    %v435 = vpack.c.b16 %v395, %v393
    %v436 = vpack.c.b16 %v398, %v396
    %v437 = vpack.c.b16 %v399, %v397
    %v438 = vpack.c.b16 %v402, %v400
    %v439 = vpack.c.b16 %v403, %v401
    %v440 = vpack.c.b16 %v406, %v404
    %v441 = vpack.c.b16 %v407, %v405
    %v442 = vpack.c.b16 %v410, %v408
    %v443 = vpack.c.b16 %v411, %v409
    %476 = vmatpush.bf16.msra.mxu0 %v426
    %477 = vmatpush.bf16.msra.mxu0 %v424
    %478 = vmatpush.bf16.msra.mxu0 %v422
    %479 = vmatpush.bf16.msra.mxu0 %v420
    %480 = vmatpush.bf16.msra.mxu0 %v418
    %481 = vmatpush.bf16.msra.mxu0 %v416
    %482 = vmatpush.bf16.msra.mxu0 %v414
    %483 = vmatpush.bf16.msra.mxu0 %v412
    %484 = vmatmul.bf16.gmra.mxu0 %v309
    %v485 = vpop.f32.mrf.mxu0
    %v486 = vadd.f32 %v312, %v485
    %v487 = vpop.f32.mrf.mxu0
    %488 = vdwg.mxu0
    %489 = vmatpush.bf16.msra.mxu0 %v442
    %490 = vmatpush.bf16.msra.mxu0 %v440
    %491 = vmatpush.bf16.msra.mxu0 %v438
    %492 = vmatpush.bf16.msra.mxu0 %v436
    %493 = vmatpush.bf16.msra.mxu0 %v434
    %494 = vmatpush.bf16.msra.mxu0 %v432
    %495 = vmatpush.bf16.msra.mxu0 %v430
    %496 = vmatpush.bf16.msra.mxu0 %v428
    %497 = vmatmul.bf16.gmra.mxu0 %v310
    %v498 = vpop.f32.mrf.mxu0
    %v499 = vadd.f32 %v486, %v498
    %v500 = vpop.f32.mrf.mxu0
    %501 = vdwg.mxu0
    %502 = vmatpush.bf16.msra.mxu0 %v427
    %503 = vmatpush.bf16.msra.mxu0 %v425
    %504 = vmatpush.bf16.msra.mxu0 %v423
    %505 = vmatpush.bf16.msra.mxu0 %v421
    %506 = vmatpush.bf16.msra.mxu0 %v419
    %507 = vmatpush.bf16.msra.mxu0 %v417
    %508 = vmatpush.bf16.msra.mxu0 %v415
    %509 = vmatpush.bf16.msra.mxu0 %v413
    %510 = vmatmul.bf16.gmra.mxu0 %v309
    %v511 = vpop.f32.mrf.mxu0
    %v512 = vadd.f32 %v313, %v511
    %v513 = vpop.f32.mrf.mxu0
    %514 = vdwg.mxu0
    %515 = vmatpush.bf16.msra.mxu0 %v443
    %516 = vmatpush.bf16.msra.mxu0 %v441
    %517 = vmatpush.bf16.msra.mxu0 %v439
    %518 = vmatpush.bf16.msra.mxu0 %v437
    %519 = vmatpush.bf16.msra.mxu0 %v435
    %520 = vmatpush.bf16.msra.mxu0 %v433
    %521 = vmatpush.bf16.msra.mxu0 %v431
    %522 = vmatpush.bf16.msra.mxu0 %v429
    %523 = vmatmul.bf16.gmra.mxu0 %v310
    %v524 = vpop.f32.mrf.mxu0
    %v525 = vadd.f32 %v512, %v524
    %v526 = vpop.f32.mrf.mxu0
    %527 = vdwg.mxu0
    %v528 = vmax.f32 %v499, 0.0
    %v529 = vmax.f32 %v525, 0.0
    %v530 = vpack.c.bf16 %v528, %v528
    %v531 = vpack.c.bf16 %v529, %v529
    %v564 = vunpack.c.l.b16 %v251
    %v565 = vunpack.c.l.b16 %v252
    %v566 = vunpack.c.l.b16 %v253
    %v567 = vunpack.c.l.b16 %v254
    %v568 = vunpack.c.l.b16 %v255
    %v569 = vunpack.c.l.b16 %v256
    %v570 = vunpack.c.l.b16 %v257
    %v571 = vunpack.c.l.b16 %v258
    %v572 = vunpack.c.l.b16 %v259
    %v573 = vunpack.c.l.b16 %v260
    %v574 = vunpack.c.l.b16 %v261
    %v575 = vunpack.c.l.b16 %v262
    %v576 = vunpack.c.l.b16 %v263
    %v577 = vunpack.c.l.b16 %v264
    %v578 = vunpack.c.l.b16 %v265
    %v579 = vunpack.c.l.b16 %v266
    %v580 = vunpack.c.l.b16 %v267
    %v581 = vunpack.c.l.b16 %v268
    %v582 = vunpack.c.l.b16 %v269
    %v583 = vunpack.c.l.b16 %v270
    %v584 = vunpack.c.l.b16 %v271
    %v585 = vunpack.c.l.b16 %v272
    %v586 = vunpack.c.l.b16 %v273
    %v587 = vunpack.c.l.b16 %v274
    %v588 = vunpack.c.l.b16 %v275
    %v589 = vunpack.c.l.b16 %v276
    %v590 = vunpack.c.l.b16 %v277
    %v591 = vunpack.c.l.b16 %v278
    %v592 = vunpack.c.l.b16 %v279
    %v593 = vunpack.c.l.b16 %v280
    %v594 = vunpack.c.l.b16 %v281
    %v595 = vunpack.c.l.b16 %v282
    %v596 = vpack.c.b16 %v565, %v564
    %v597 = vpack.c.b16 %v567, %v566
    %v598 = vpack.c.b16 %v569, %v568
    %v599 = vpack.c.b16 %v571, %v570
    %v600 = vpack.c.b16 %v573, %v572
    %v601 = vpack.c.b16 %v575, %v574
    %v602 = vpack.c.b16 %v577, %v576
    %v603 = vpack.c.b16 %v579, %v578
    %v604 = vpack.c.b16 %v581, %v580
    %v605 = vpack.c.b16 %v583, %v582
    %v606 = vpack.c.b16 %v585, %v584
    %v607 = vpack.c.b16 %v587, %v586
    %v608 = vpack.c.b16 %v589, %v588
    %v609 = vpack.c.b16 %v591, %v590
    %v610 = vpack.c.b16 %v593, %v592
    %v611 = vpack.c.b16 %v595, %v594
    %628 = vmatpush.bf16.msra.mxu0 %v603
    %629 = vmatpush.bf16.msra.mxu0 %v602
    %630 = vmatpush.bf16.msra.mxu0 %v601
    %631 = vmatpush.bf16.msra.mxu0 %v600
    %632 = vmatpush.bf16.msra.mxu0 %v599
    %633 = vmatpush.bf16.msra.mxu0 %v598
    %634 = vmatpush.bf16.msra.mxu0 %v597
    %635 = vmatpush.bf16.msra.mxu0 %v596
    %636 = vmatmul.bf16.gmra.mxu0 %v309
    %v637 = vpop.f32.mrf.mxu0
    %v638 = vadd.f32 0.0, %v637
    %v639 = vpop.f32.mrf.mxu0
    %640 = vdwg.mxu0
    %641 = vmatpush.bf16.msra.mxu0 %v611
    %642 = vmatpush.bf16.msra.mxu0 %v610
    %643 = vmatpush.bf16.msra.mxu0 %v609
    %644 = vmatpush.bf16.msra.mxu0 %v608
    %645 = vmatpush.bf16.msra.mxu0 %v607
    %646 = vmatpush.bf16.msra.mxu0 %v606
    %647 = vmatpush.bf16.msra.mxu0 %v605
    %648 = vmatpush.bf16.msra.mxu0 %v604
    %649 = vmatmul.bf16.gmra.mxu0 %v310
    %v650 = vpop.f32.mrf.mxu0
    %v651 = vadd.f32 %v638, %v650
    %v652 = vpop.f32.mrf.mxu0
    %653 = vdwg.mxu0
    %v686 = vunpack.c.l.b16 %v219
    %v687 = vunpack.c.l.b16 %v220
    %v688 = vunpack.c.l.b16 %v221
    %v689 = vunpack.c.l.b16 %v222
    %v690 = vunpack.c.l.b16 %v223
    %v691 = vunpack.c.l.b16 %v224
    %v692 = vunpack.c.l.b16 %v225
    %v693 = vunpack.c.l.b16 %v226
    %v694 = vunpack.c.l.b16 %v227
    %v695 = vunpack.c.l.b16 %v228
    %v696 = vunpack.c.l.b16 %v229
    %v697 = vunpack.c.l.b16 %v230
    %v698 = vunpack.c.l.b16 %v231
    %v699 = vunpack.c.l.b16 %v232
    %v700 = vunpack.c.l.b16 %v233
    %v701 = vunpack.c.l.b16 %v234
    %v702 = vunpack.c.l.b16 %v235
    %v703 = vunpack.c.l.b16 %v236
    %v704 = vunpack.c.l.b16 %v237
    %v705 = vunpack.c.l.b16 %v238
    %v706 = vunpack.c.l.b16 %v239
    %v707 = vunpack.c.l.b16 %v240
    %v708 = vunpack.c.l.b16 %v241
    %v709 = vunpack.c.l.b16 %v242
    %v710 = vunpack.c.l.b16 %v243
    %v711 = vunpack.c.l.b16 %v244
    %v712 = vunpack.c.l.b16 %v245
    %v713 = vunpack.c.l.b16 %v246
    %v714 = vunpack.c.l.b16 %v247
    %v715 = vunpack.c.l.b16 %v248
    %v716 = vunpack.c.l.b16 %v249
    %v717 = vunpack.c.l.b16 %v250
    %v718 = vpack.c.b16 %v687, %v686
    %v719 = vpack.c.b16 %v689, %v688
    %v720 = vpack.c.b16 %v691, %v690
    %v721 = vpack.c.b16 %v693, %v692
    %v722 = vpack.c.b16 %v695, %v694
    %v723 = vpack.c.b16 %v697, %v696
    %v724 = vpack.c.b16 %v699, %v698
    %v725 = vpack.c.b16 %v701, %v700
    %v726 = vpack.c.b16 %v703, %v702
    %v727 = vpack.c.b16 %v705, %v704
    %v728 = vpack.c.b16 %v707, %v706
    %v729 = vpack.c.b16 %v709, %v708
    %v730 = vpack.c.b16 %v711, %v710
    %v731 = vpack.c.b16 %v713, %v712
    %v732 = vpack.c.b16 %v715, %v714
    %v733 = vpack.c.b16 %v717, %v716
    %750 = vmatpush.bf16.msra.mxu0 %v725
    %751 = vmatpush.bf16.msra.mxu0 %v724
    %752 = vmatpush.bf16.msra.mxu0 %v723
    %753 = vmatpush.bf16.msra.mxu0 %v722
    %754 = vmatpush.bf16.msra.mxu0 %v721
    %755 = vmatpush.bf16.msra.mxu0 %v720
    %756 = vmatpush.bf16.msra.mxu0 %v719
    %757 = vmatpush.bf16.msra.mxu0 %v718
    %758 = vmatmul.bf16.gmra.mxu0 %v530
    %v759 = vpop.f32.mrf.mxu0
    %v760 = vadd.f32 %v651, %v759
    %v761 = vpop.f32.mrf.mxu0
    %762 = vdwg.mxu0
    %763 = vmatpush.bf16.msra.mxu0 %v733
    %764 = vmatpush.bf16.msra.mxu0 %v732
    %765 = vmatpush.bf16.msra.mxu0 %v731
    %766 = vmatpush.bf16.msra.mxu0 %v730
    %767 = vmatpush.bf16.msra.mxu0 %v729
    %768 = vmatpush.bf16.msra.mxu0 %v728
    %769 = vmatpush.bf16.msra.mxu0 %v727
    %770 = vmatpush.bf16.msra.mxu0 %v726
    %771 = vmatmul.bf16.gmra.mxu0 %v531
    %v772 = vpop.f32.mrf.mxu0
    %v773 = vadd.f32 %v760, %v772
    %v774 = vpop.f32.mrf.mxu0
    %775 = vdwg.mxu0
    %v776 = vperm.slane %v300, 0
    %v777 = vadd.f32 %v773, %v776
    %778 = vmatpush.msra.mxu0 %v298
    %779 = vmatpush.msra.mxu0 %v297
    %780 = vmatpush.msra.mxu0 %v296
    %781 = vmatpush.msra.mxu0 %v295
    %782 = vmatpush.msra.mxu0 %v294
    %783 = vmatpush.msra.mxu0 %v293
    %784 = vmatpush.msra.mxu0 %v292
    %785 = vmatpush.msra.mxu0 %v291
    %786 = vmatpush.msra.mxu0 %v290
    %787 = vmatpush.msra.mxu0 %v289
    %788 = vmatpush.msra.mxu0 %v288
    %789 = vmatpush.msra.mxu0 %v287
    %790 = vmatpush.msra.mxu0 %v286
    %791 = vmatpush.msra.mxu0 %v285
    %792 = vmatpush.msra.mxu0 %v284
    %793 = vmatpush.msra.mxu0 %v283
    %794 = vmatmul.f32.gmra.mxu0 %v777
    %v795 = vpop.f32.mrf.mxu0
    %v796 = vadd.f32 0.0, %v795
    %797 = vdwg.mxu0
    %v798 = vsub.f32 %v777, %v796
    %v799 = vmul.f32 %v798, %v798
    %800 = vmatpush.msra.mxu0 %v298
    %801 = vmatpush.msra.mxu0 %v297
    %802 = vmatpush.msra.mxu0 %v296
    %803 = vmatpush.msra.mxu0 %v295
    %804 = vmatpush.msra.mxu0 %v294
    %805 = vmatpush.msra.mxu0 %v293
    %806 = vmatpush.msra.mxu0 %v292
    %807 = vmatpush.msra.mxu0 %v291
    %808 = vmatpush.msra.mxu0 %v290
    %809 = vmatpush.msra.mxu0 %v289
    %810 = vmatpush.msra.mxu0 %v288
    %811 = vmatpush.msra.mxu0 %v287
    %812 = vmatpush.msra.mxu0 %v286
    %813 = vmatpush.msra.mxu0 %v285
    %814 = vmatpush.msra.mxu0 %v284
    %815 = vmatpush.msra.mxu0 %v283
    %816 = vmatmul.f32.gmra.mxu0 %v799
    %v817 = vpop.f32.mrf.mxu0
    %v818 = vadd.f32 1e-05, %v817
    %819 = vdwg.mxu0
    %v820 = vrsqrt.pop %v818
    %v821 = vmul.f32 %v820, %v818
    %v822 = vmul.f32 %v821, %v820
    %v823 = vmul.f32 0.5, %v822
    %v824 = vsub.f32 1.5, %v823
    %v825 = vmul.f32 %v820, %v824
    %vm826 = vweird.f32 %v818
    %vm827 = vweird.f32 %v820
    %vm828 = vmor %vm826, %vm827
    %v829 = vsel %vm828, %v820, %v825
    %v830 = vperm.slane %v301, 0
    %v831 = vmul.f32 %v829, %v830
    %v832 = vmul.f32 %v798, %v831
    %v833 = vperm.slane %v302, 0
    %v834 = vadd.f32 %v832, %v833
    %v835 = vld [vmem:[#allocation13] sm:$0xff]
    %v836 = vld [vmem:[#allocation13 + $0x8] sm:$0xff]
    %v837 = vld [vmem:[#allocation13 + $0x10] sm:$0xff]
    %v838 = vld [vmem:[#allocation13 + $0x18] sm:$0xff]
    %v839 = vld [vmem:[#allocation13 + $0x20] sm:$0xff]
    %v840 = vld [vmem:[#allocation13 + $0x28] sm:$0xff]
    %v841 = vld [vmem:[#allocation13 + $0x30] sm:$0xff]
    %v842 = vld [vmem:[#allocation13 + $0x38] sm:$0xff]
    %v843 = vld [vmem:[#allocation13 + $0x40] sm:$0xff]
    %v844 = vld [vmem:[#allocation13 + $0x48] sm:$0xff]
    %v845 = vld [vmem:[#allocation13 + $0x50] sm:$0xff]
    %v846 = vld [vmem:[#allocation13 + $0x58] sm:$0xff]
    %v847 = vld [vmem:[#allocation13 + $0x60] sm:$0xff]
    %v848 = vld [vmem:[#allocation13 + $0x68] sm:$0xff]
    %v849 = vld [vmem:[#allocation13 + $0x70] sm:$0xff]
    %v850 = vld [vmem:[#allocation13 + $0x78] sm:$0xff]
    %v851 = vld [vmem:[#allocation14] sm:$0xf]
    %v852 = vld [vmem:[#allocation14 + $0x4] sm:$0xf]
    %v853 = vld [vmem:[#allocation14 + $0x8] sm:$0xf]
    %v854 = vld [vmem:[#allocation14 + $0xc] sm:$0xf]
    %v855 = vld [vmem:[#allocation14 + $0x10] sm:$0xf]
    %v856 = vld [vmem:[#allocation14 + $0x14] sm:$0xf]
    %v857 = vld [vmem:[#allocation14 + $0x18] sm:$0xf]
    %v858 = vld [vmem:[#allocation14 + $0x1c] sm:$0xf]
    %v859 = vld [vmem:[#allocation14 + $0x20] sm:$0xf]
    %v860 = vld [vmem:[#allocation14 + $0x24] sm:$0xf]
    %v861 = vld [vmem:[#allocation14 + $0x28] sm:$0xf]
    %v862 = vld [vmem:[#allocation14 + $0x2c] sm:$0xf]
    %v863 = vld [vmem:[#allocation14 + $0x30] sm:$0xf]
    %v864 = vld [vmem:[#allocation14 + $0x34] sm:$0xf]
    %v865 = vld [vmem:[#allocation14 + $0x38] sm:$0xf]
    %v866 = vld [vmem:[#allocation14 + $0x3c] sm:$0xf]
    %v867 = vld [vmem:[#allocation14 + $0x40] sm:$0xf]
    %v868 = vld [vmem:[#allocation14 + $0x44] sm:$0xf]
    %v869 = vld [vmem:[#allocation14 + $0x48] sm:$0xf]
    %v870 = vld [vmem:[#allocation14 + $0x4c] sm:$0xf]
    %v871 = vld [vmem:[#allocation14 + $0x50] sm:$0xf]
    %v872 = vld [vmem:[#allocation14 + $0x54] sm:$0xf]
    %v873 = vld [vmem:[#allocation14 + $0x58] sm:$0xf]
    %v874 = vld [vmem:[#allocation14 + $0x5c] sm:$0xf]
    %v875 = vld [vmem:[#allocation14 + $0x60] sm:$0xf]
    %v876 = vld [vmem:[#allocation14 + $0x64] sm:$0xf]
    %v877 = vld [vmem:[#allocation14 + $0x68] sm:$0xf]
    %v878 = vld [vmem:[#allocation14 + $0x6c] sm:$0xf]
    %v879 = vld [vmem:[#allocation14 + $0x70] sm:$0xf]
    %v880 = vld [vmem:[#allocation14 + $0x74] sm:$0xf]
    %v881 = vld [vmem:[#allocation14 + $0x78] sm:$0xf]
    %v882 = vld [vmem:[#allocation14 + $0x7c] sm:$0xf]
    %v883 = vld [vmem:[#allocation17] sm:$0xff]
    %v884 = vld [vmem:[#allocation17 + $0x8] sm:$0xff]
    %v885 = vld [vmem:[#allocation17 + $0x10] sm:$0xff]
    %v886 = vld [vmem:[#allocation17 + $0x18] sm:$0xff]
    %v887 = vld [vmem:[#allocation17 + $0x20] sm:$0xff]
    %v888 = vld [vmem:[#allocation17 + $0x28] sm:$0xff]
    %v889 = vld [vmem:[#allocation17 + $0x30] sm:$0xff]
    %v890 = vld [vmem:[#allocation17 + $0x38] sm:$0xff]
    %v891 = vld [vmem:[#allocation17 + $0x40] sm:$0xff]
    %v892 = vld [vmem:[#allocation17 + $0x48] sm:$0xff]
    %v893 = vld [vmem:[#allocation17 + $0x50] sm:$0xff]
    %v894 = vld [vmem:[#allocation17 + $0x58] sm:$0xff]
    %v895 = vld [vmem:[#allocation17 + $0x60] sm:$0xff]
    %v896 = vld [vmem:[#allocation17 + $0x68] sm:$0xff]
    %v897 = vld [vmem:[#allocation17 + $0x70] sm:$0xff]
    %v898 = vld [vmem:[#allocation17 + $0x78] sm:$0xff]
    %v899 = vld [vmem:[#allocation16] ss:$4 sm:$0x3]
    %v900 = vld [vmem:[#allocation16 + $0x1] sm:$0x1]
    %v901 = vld [vmem:[#allocation16 + $0x2] sm:$0x1]
    %v902 = vld [vmem:[#allocation16 + $0x3] sm:$0x1]
    %v903 = vpack.c.bf16 %v834, %v834
    %v905 = vperm.slane %v899, 0
    %v906 = vperm.slane %v899, 1
    %v925 = vunpack.c.l.b16 %v835
    %v926 = vunpack.c.h.b16 %v835
    %v927 = vunpack.c.l.b16 %v836
    %v928 = vunpack.c.h.b16 %v836
    %v929 = vunpack.c.l.b16 %v837
    %v930 = vunpack.c.h.b16 %v837
    %v931 = vunpack.c.l.b16 %v838
    %v932 = vunpack.c.h.b16 %v838
    %v933 = vunpack.c.l.b16 %v839
    %v934 = vunpack.c.h.b16 %v839
    %v935 = vunpack.c.l.b16 %v840
    %v936 = vunpack.c.h.b16 %v840
    %v937 = vunpack.c.l.b16 %v841
    %v938 = vunpack.c.h.b16 %v841
    %v939 = vunpack.c.l.b16 %v842
    %v940 = vunpack.c.h.b16 %v842
    %v941 = vunpack.c.l.b16 %v843
    %v942 = vunpack.c.h.b16 %v843
    %v943 = vunpack.c.l.b16 %v844
    %v944 = vunpack.c.h.b16 %v844
    %v945 = vunpack.c.l.b16 %v845
    %v946 = vunpack.c.h.b16 %v845
    %v947 = vunpack.c.l.b16 %v846
    %v948 = vunpack.c.h.b16 %v846
    %v949 = vunpack.c.l.b16 %v847
    %v950 = vunpack.c.h.b16 %v847
    %v951 = vunpack.c.l.b16 %v848
    %v952 = vunpack.c.h.b16 %v848
    %v953 = vunpack.c.l.b16 %v849
    %v954 = vunpack.c.h.b16 %v849
    %v955 = vunpack.c.l.b16 %v850
    %v956 = vunpack.c.h.b16 %v850
    %v957 = vpack.c.b16 %v927, %v925
    %v958 = vpack.c.b16 %v928, %v926
    %v959 = vpack.c.b16 %v931, %v929
    %v960 = vpack.c.b16 %v932, %v930
    %v961 = vpack.c.b16 %v935, %v933
    %v962 = vpack.c.b16 %v936, %v934
    %v963 = vpack.c.b16 %v939, %v937
    %v964 = vpack.c.b16 %v940, %v938
    %v965 = vpack.c.b16 %v943, %v941
    %v966 = vpack.c.b16 %v944, %v942
    %v967 = vpack.c.b16 %v947, %v945
    %v968 = vpack.c.b16 %v948, %v946
    %v969 = vpack.c.b16 %v951, %v949
    %v970 = vpack.c.b16 %v952, %v950
    %v971 = vpack.c.b16 %v955, %v953
    %v972 = vpack.c.b16 %v956, %v954
    %989 = vmatpush.bf16.msra.mxu0 %v971
    %990 = vmatpush.bf16.msra.mxu0 %v969
    %991 = vmatpush.bf16.msra.mxu0 %v967
    %992 = vmatpush.bf16.msra.mxu0 %v965
    %993 = vmatpush.bf16.msra.mxu0 %v963
    %994 = vmatpush.bf16.msra.mxu0 %v961
    %995 = vmatpush.bf16.msra.mxu0 %v959
    %996 = vmatpush.bf16.msra.mxu0 %v957
    %997 = vmatmul.bf16.gmra.mxu0 %v903
    %v998 = vpop.f32.mrf.mxu0
    %v999 = vadd.f32 %v905, %v998
    %v1000 = vpop.f32.mrf.mxu0
    %1001 = vdwg.mxu0
    %1002 = vmatpush.bf16.msra.mxu0 %v972
    %1003 = vmatpush.bf16.msra.mxu0 %v970
    %1004 = vmatpush.bf16.msra.mxu0 %v968
    %1005 = vmatpush.bf16.msra.mxu0 %v966
    %1006 = vmatpush.bf16.msra.mxu0 %v964
    %1007 = vmatpush.bf16.msra.mxu0 %v962
    %1008 = vmatpush.bf16.msra.mxu0 %v960
    %1009 = vmatpush.bf16.msra.mxu0 %v958
    %1010 = vmatmul.bf16.gmra.mxu0 %v903
    %v1011 = vpop.f32.mrf.mxu0
    %v1012 = vadd.f32 %v906, %v1011
    %v1013 = vpop.f32.mrf.mxu0
    %1014 = vdwg.mxu0
    %v1015 = vmax.f32 %v999, 0.0
    %v1016 = vmax.f32 %v1012, 0.0
    %v1017 = vpack.c.bf16 %v1015, %v1015
    %v1018 = vpack.c.bf16 %v1016, %v1016
    %v1051 = vunpack.c.l.b16 %v851
    %v1052 = vunpack.c.l.b16 %v852
    %v1053 = vunpack.c.l.b16 %v853
    %v1054 = vunpack.c.l.b16 %v854
    %v1055 = vunpack.c.l.b16 %v855
    %v1056 = vunpack.c.l.b16 %v856
    %v1057 = vunpack.c.l.b16 %v857
    %v1058 = vunpack.c.l.b16 %v858
    %v1059 = vunpack.c.l.b16 %v859
    %v1060 = vunpack.c.l.b16 %v860
    %v1061 = vunpack.c.l.b16 %v861
    %v1062 = vunpack.c.l.b16 %v862
    %v1063 = vunpack.c.l.b16 %v863
    %v1064 = vunpack.c.l.b16 %v864
    %v1065 = vunpack.c.l.b16 %v865
    %v1066 = vunpack.c.l.b16 %v866
    %v1067 = vunpack.c.l.b16 %v867
    %v1068 = vunpack.c.l.b16 %v868
    %v1069 = vunpack.c.l.b16 %v869
    %v1070 = vunpack.c.l.b16 %v870
    %v1071 = vunpack.c.l.b16 %v871
    %v1072 = vunpack.c.l.b16 %v872
    %v1073 = vunpack.c.l.b16 %v873
    %v1074 = vunpack.c.l.b16 %v874
    %v1075 = vunpack.c.l.b16 %v875
    %v1076 = vunpack.c.l.b16 %v876
    %v1077 = vunpack.c.l.b16 %v877
    %v1078 = vunpack.c.l.b16 %v878
    %v1079 = vunpack.c.l.b16 %v879
    %v1080 = vunpack.c.l.b16 %v880
    %v1081 = vunpack.c.l.b16 %v881
    %v1082 = vunpack.c.l.b16 %v882
    %v1083 = vpack.c.b16 %v1052, %v1051
    %v1084 = vpack.c.b16 %v1054, %v1053
    %v1085 = vpack.c.b16 %v1056, %v1055
    %v1086 = vpack.c.b16 %v1058, %v1057
    %v1087 = vpack.c.b16 %v1060, %v1059
    %v1088 = vpack.c.b16 %v1062, %v1061
    %v1089 = vpack.c.b16 %v1064, %v1063
    %v1090 = vpack.c.b16 %v1066, %v1065
    %v1091 = vpack.c.b16 %v1068, %v1067
    %v1092 = vpack.c.b16 %v1070, %v1069
    %v1093 = vpack.c.b16 %v1072, %v1071
    %v1094 = vpack.c.b16 %v1074, %v1073
    %v1095 = vpack.c.b16 %v1076, %v1075
    %v1096 = vpack.c.b16 %v1078, %v1077
    %v1097 = vpack.c.b16 %v1080, %v1079
    %v1098 = vpack.c.b16 %v1082, %v1081
    %1115 = vmatpush.bf16.msra.mxu0 %v1090
    %1116 = vmatpush.bf16.msra.mxu0 %v1089
    %1117 = vmatpush.bf16.msra.mxu0 %v1088
    %1118 = vmatpush.bf16.msra.mxu0 %v1087
    %1119 = vmatpush.bf16.msra.mxu0 %v1086
    %1120 = vmatpush.bf16.msra.mxu0 %v1085
    %1121 = vmatpush.bf16.msra.mxu0 %v1084
    %1122 = vmatpush.bf16.msra.mxu0 %v1083
    %1123 = vmatmul.bf16.gmra.mxu0 %v1017
    %v1124 = vpop.f32.mrf.mxu0
    %v1125 = vadd.f32 %v834, %v1124
    %v1126 = vpop.f32.mrf.mxu0
    %1127 = vdwg.mxu0
    %1128 = vmatpush.bf16.msra.mxu0 %v1098
    %1129 = vmatpush.bf16.msra.mxu0 %v1097
    %1130 = vmatpush.bf16.msra.mxu0 %v1096
    %1131 = vmatpush.bf16.msra.mxu0 %v1095
    %1132 = vmatpush.bf16.msra.mxu0 %v1094
    %1133 = vmatpush.bf16.msra.mxu0 %v1093
    %1134 = vmatpush.bf16.msra.mxu0 %v1092
    %1135 = vmatpush.bf16.msra.mxu0 %v1091
    %1136 = vmatmul.bf16.gmra.mxu0 %v1018
    %v1137 = vpop.f32.mrf.mxu0
    %v1138 = vadd.f32 %v1125, %v1137
    %v1139 = vpop.f32.mrf.mxu0
    %1140 = vdwg.mxu0
    %v1141 = vperm.slane %v900, 0
    %v1142 = vadd.f32 %v1138, %v1141
    %1143 = vmatpush.msra.mxu0 %v898
    %1144 = vmatpush.msra.mxu0 %v897
    %1145 = vmatpush.msra.mxu0 %v896
    %1146 = vmatpush.msra.mxu0 %v895
    %1147 = vmatpush.msra.mxu0 %v894
    %1148 = vmatpush.msra.mxu0 %v893
    %1149 = vmatpush.msra.mxu0 %v892
    %1150 = vmatpush.msra.mxu0 %v891
    %1151 = vmatpush.msra.mxu0 %v890
    %1152 = vmatpush.msra.mxu0 %v889
    %1153 = vmatpush.msra.mxu0 %v888
    %1154 = vmatpush.msra.mxu0 %v887
    %1155 = vmatpush.msra.mxu0 %v886
    %1156 = vmatpush.msra.mxu0 %v885
    %1157 = vmatpush.msra.mxu0 %v884
    %1158 = vmatpush.msra.mxu0 %v883
    %1159 = vmatmul.f32.gmra.mxu0 %v1142
    %v1160 = vpop.f32.mrf.mxu0
    %v1161 = vadd.f32 0.0, %v1160
    %1162 = vdwg.mxu0
    %v1163 = vsub.f32 %v1142, %v1161
    %v1164 = vmul.f32 %v1163, %v1163
    %1165 = vmatpush.msra.mxu0 %v898
    %1166 = vmatpush.msra.mxu0 %v897
    %1167 = vmatpush.msra.mxu0 %v896
    %1168 = vmatpush.msra.mxu0 %v895
    %1169 = vmatpush.msra.mxu0 %v894
    %1170 = vmatpush.msra.mxu0 %v893
    %1171 = vmatpush.msra.mxu0 %v892
    %1172 = vmatpush.msra.mxu0 %v891
    %1173 = vmatpush.msra.mxu0 %v890
    %1174 = vmatpush.msra.mxu0 %v889
    %1175 = vmatpush.msra.mxu0 %v888
    %1176 = vmatpush.msra.mxu0 %v887
    %1177 = vmatpush.msra.mxu0 %v886
    %1178 = vmatpush.msra.mxu0 %v885
    %1179 = vmatpush.msra.mxu0 %v884
    %1180 = vmatpush.msra.mxu0 %v883
    %1181 = vmatmul.f32.gmra.mxu0 %v1164
    %v1182 = vpop.f32.mrf.mxu0
    %v1183 = vadd.f32 1e-05, %v1182
    %1184 = vdwg.mxu0
    %v1185 = vrsqrt.pop %v1183
    %v1186 = vmul.f32 %v1185, %v1183
    %v1187 = vmul.f32 %v1186, %v1185
    %v1188 = vmul.f32 0.5, %v1187
    %v1189 = vsub.f32 1.5, %v1188
    %v1190 = vmul.f32 %v1185, %v1189
    %vm1191 = vweird.f32 %v1183
    %vm1192 = vweird.f32 %v1185
    %vm1193 = vmor %vm1191, %vm1192
    %v1194 = vsel %vm1193, %v1185, %v1190
    %v1195 = vperm.slane %v901, 0
    %v1196 = vmul.f32 %v1194, %v1195
    %v1197 = vmul.f32 %v1163, %v1196
    %v1198 = vperm.slane %v902, 0
    %v1199 = vadd.f32 %v1197, %v1198
    %1200 = vst [vmem:[#allocation19] sm:$0x3] %v1199
    // Predicated region
    $region82: #{tpu_custom_call.1} parent=1 // pred_check
      _
    $region83: #{tpu_custom_call.1} parent=1 // pred_check_branch
      %1202 = sbr.rel (0) target = $region85
    $region84: #{tpu_custom_call.1} parent=1 // pred_region
      %1204 = vsyncadd [#allocation4], 0
      %s1206 = sshll.u32 [#allocation19], 4
      %s1207 = int_to_ptr.vmem [resolvable:$true] %s1206
      %s1208 = sshll.u32 %s10, 4
      %s1209 = int_to_ptr.hbm [resolvable:$true] %s1208
      %1211 = dma.vmem_to_hbm [thread:$0]  %s1207, 32, %s1209, [#allocation4]
    $region85: #{tpu_custom_call.1} parent=1 // pred_fallthru
      _
    // Predicated region
    $region86: #{tpu_custom_call.1} parent=1 // pred_check
      _
    $region87: #{tpu_custom_call.1} parent=1 // pred_check_branch
      %1213 = sbr.rel (0) target = $region89
    $region88: #{tpu_custom_call.1} parent=1 // pred_region
      %1215 = dma.done [#allocation4], 32
    $region89: #{tpu_custom_call.1} parent=1 // pred_fallthru
      _
    %1216 = vsyncpa [#allocation3], 1
    %1217 = vsyncpa [#allocation6], 1
    %1218 = vsyncpa [#allocation9], 1
    %1219 = vsyncpa [#allocation12], 1
    %1220 = vsyncpa [#allocation15], 1
    %1221 = vsyncpa [#allocation18], 1
    %1222 = vsyncpa [#allocation4], 1

</llo_original>
